<compile_context>
chip_gen: v6e
topology: v6e:2x2x1
jax: 0.10.0
libtpu: 0.0.40
codegen_flags: <defaults>
</compile_context>

<pallas_src>
import functools

import jax
import jax.numpy as jnp
from jax.experimental import pallas as pl
from jax.experimental.pallas import tpu as pltpu


POOL = 2  # MaxPool2d(2, 2)


# ----------------------------------------------------------------------------
# Pallas kernels
# ----------------------------------------------------------------------------
def _conv_relu_pool_kernel(w_ref, b_ref, p_ref, o_ref, *, n_taps):
    """Fused conv (as matmul) + bias + ReLU + 2x2 max-pool.

    w_ref: (n_taps, Cout, K) tap-packed weights, K = Cin * 6 * 6
    b_ref: (Cout, 1)
    p_ref: (K, M) stride-2 im2col patches, M = B*Hp*Wp (lane-dense)
    o_ref: (Cout, M)

    maxpool(relu(conv + b)) == relu(max_t(conv_tap_t) + b): bias is per output
    row and ReLU is monotone, so the pool is an elementwise max of the taps.
    """
    p = p_ref[...]                       # load patches once, reuse for all taps
    acc = jnp.dot(w_ref[0], p, preferred_element_type=jnp.float32)
    for t in range(1, n_taps):
        acc = jnp.maximum(
            acc, jnp.dot(w_ref[t], p, preferred_element_type=jnp.float32))
    o_ref[...] = jnp.maximum(acc + b_ref[...], 0.0).astype(o_ref.dtype)


def _mlp3_kernel(x_ref, w1_ref, b1_ref, w2_ref, b2_ref, w3_ref, b3_ref, o_ref):
    """Fused fc1 -> ReLU -> fc2 -> ReLU -> fc3; intermediates never leave VMEM."""
    h = jnp.dot(x_ref[...], w1_ref[...], preferred_element_type=jnp.float32)
    h = jnp.maximum(h + b1_ref[...], 0.0)
    h = jnp.dot(h, w2_ref[...], preferred_element_type=jnp.float32)
    h = jnp.maximum(h + b2_ref[...], 0.0)
    h = jnp.dot(h, w3_ref[...], preferred_element_type=jnp.float32)
    o_ref[...] = (h + b3_ref[...]).astype(o_ref.dtype)


# ----------------------------------------------------------------------------
# Pallas wrappers (whole problem fits a single VMEM tile at these sizes)
# ----------------------------------------------------------------------------
def _full_spec(shape):
    return pl.BlockSpec(shape, lambda *_: (0,) * len(shape))


_SERIAL = pltpu.CompilerParams(dimension_semantics=("arbitrary",))


def conv_relu_pool(patches, w_taps, bias):
    n_taps, cout, k = w_taps.shape
    k2, m = patches.shape
    assert k == k2
    return pl.pallas_call(
        functools.partial(_conv_relu_pool_kernel, n_taps=n_taps),
        out_shape=jax.ShapeDtypeStruct((cout, m), jnp.float32),
        grid=(1,),
        in_specs=[_full_spec((n_taps, cout, k)),
                  _full_spec((cout, 1)),
                  _full_spec((k, m))],
        out_specs=_full_spec((cout, m)),
        compiler_params=_SERIAL,
    )(w_taps, bias, patches)


def mlp3(x, w1, b1, w2, b2, w3, b3):
    rows = x.shape[0]
    n_out = w3.shape[1]
    args = (x, w1, b1, w2, b2, w3, b3)
    return pl.pallas_call(
        _mlp3_kernel,
        out_shape=jax.ShapeDtypeStruct((rows, n_out), jnp.float32),
        grid=(1,),
        in_specs=[_full_spec(a.shape) for a in args],
        out_specs=_full_spec((rows, n_out)),
        compiler_params=_SERIAL,
    )(*args)


# ----------------------------------------------------------------------------
# XLA glue: stride-2 im2col shared by the four pool taps (pure data movement)
# ----------------------------------------------------------------------------
def _extract_pool_patches(x_cbhw, ksize):
    """x_cbhw: (Cin, B, H, W) -> (Cin*U*U, B*Hp*Wp), with U = ksize + POOL - 1.

    Patch row (cin, u, v), output column (b, py, px) holds
    x[cin, b, POOL*py + u, POOL*px + v].
    """
    cin, b, h, w = x_cbhw.shape
    hp = (h - ksize + 1) // POOL
    wp = (w - ksize + 1) // POOL
    u_sz = ksize + POOL - 1
    cols = []
    for u in range(u_sz):
        for v in range(u_sz):
            cols.append(x_cbhw[:, :,
                               u:u + POOL * (hp - 1) + 1:POOL,
                               v:v + POOL * (wp - 1) + 1:POOL])  # (Cin,B,Hp,Wp)
    patches = jnp.stack(cols, axis=1)                 # (Cin, U*U, B, Hp, Wp)
    return patches.reshape(cin * u_sz * u_sz, b * hp * wp)


# ----------------------------------------------------------------------------
# One-time, host-side parameter packing (outside the jitted forward)
# ----------------------------------------------------------------------------
def _pack_conv_taps(w):
    """(Cout, Cin, KH, KW) OIHW -> (POOL*POOL, Cout, Cin*U*U) tap-packed weights.

    Tap (dy, dx) evaluates the conv at pool-window offset (dy, dx); its weight
    is the KHxKW kernel zero-embedded at offset (dy, dx) inside a UxU window so
    all taps share the single stride-2 im2col patches matrix.
    """
    cout, cin, kh, kw = w.shape
    u_sz = kh + POOL - 1
    taps = []
    for dy in range(POOL):
        for dx in range(POOL):
            wt = jnp.zeros((cout, cin, u_sz, u_sz), w.dtype)
            wt = wt.at[:, :, dy:dy + kh, dx:dx + kw].set(w)
            taps.append(wt.reshape(cout, cin * u_sz * u_sz))
    return jnp.stack(taps, axis=0)


def pack_params(p):
    return {
        "conv1_wt": _pack_conv_taps(p["conv1_w"]),   # (4, 6, 108)
        "conv1_b": p["conv1_b"].reshape(-1, 1),      # (6, 1)
        "conv2_wt": _pack_conv_taps(p["conv2_w"]),   # (4, 16, 216)
        "conv2_b": p["conv2_b"].reshape(-1, 1),      # (16, 1)
        "fc1_w": p["fc1_w"].T, "fc1_b": p["fc1_b"].reshape(1, -1),
        "fc2_w": p["fc2_w"].T, "fc2_b": p["fc2_b"].reshape(1, -1),
        "fc3_w": p["fc3_w"].T, "fc3_b": p["fc3_b"].reshape(1, -1),
    }


# ----------------------------------------------------------------------------
# Full forward pass (mirrors Net.forward) — 3 pallas_calls total
# ----------------------------------------------------------------------------
@jax.jit
def net_forward(x, pp):
    b = x.shape[0]
    # conv1 + ReLU + 2x2 max-pool  (one Pallas kernel)
    x_cb = jnp.transpose(x, (1, 0, 2, 3))                     # (3, B, 32, 32)
    p1 = _extract_pool_patches(x_cb, 5)                       # (108, B*14*14)
    y1 = conv_relu_pool(p1, pp["conv1_wt"], pp["conv1_b"])    # (6, B*196)
    # conv2 + ReLU + 2x2 max-pool  (one Pallas kernel)
    p2 = _extract_pool_patches(y1.reshape(6, b, 14, 14), 5)   # (216, B*5*5)
    y2 = conv_relu_pool(p2, pp["conv2_wt"], pp["conv2_b"])    # (16, B*25)
    # flatten in torch's (c, h, w) order to match x.view(-1, 16*5*5)
    flat = y2.reshape(16, b, 25).transpose(1, 0, 2).reshape(b, 16 * 5 * 5)
    # fc1 -> ReLU -> fc2 -> ReLU -> fc3  (one Pallas kernel)
    return mlp3(flat, pp["fc1_w"], pp["fc1_b"], pp["fc2_w"], pp["fc2_b"],
                pp["fc3_w"], pp["fc3_b"])


# ----------------------------------------------------------------------------
# Pure-JAX reference (for correctness check)
# ----------------------------------------------------------------------------
def reference_forward(x, p):
    hi = jax.lax.Precision.HIGHEST

    def conv(x, w, b):
        y = jax.lax.conv_general_dilated(
            x, w, (1, 1), "VALID",
            dimension_numbers=("NCHW", "OIHW", "NCHW"), precision=hi)
        return jax.nn.relu(y + b[None, :, None, None])

    def pool(x):  # NCHW
        B, C, H, W = x.shape
        return x.reshape(B, C, H // 2, 2, W // 2, 2).max(axis=(3, 5))

    y = pool(conv(x, p["conv1_w"], p["conv1_b"]))
    y = pool(conv(y, p["conv2_w"], p["conv2_b"]))
    y = y.reshape(x.shape[0], -1)
    y = jax.nn.relu(jnp.dot(y, p["fc1_w"].T, precision=hi) + p["fc1_b"])
    y = jax.nn.relu(jnp.dot(y, p["fc2_w"].T, precision=hi) + p["fc2_b"])
    y = jnp.dot(y, p["fc3_w"].T, precision=hi) + p["fc3_b"]
    return y


# ----------------------------------------------------------------------------
# Deterministic parameter init (PyTorch-style fan-in uniform bounds)
# ----------------------------------------------------------------------------
def init_params(key):
    def u(k, shape, fan_in):
        bound = 1.0 / jnp.sqrt(float(fan_in))
        return jax.random.uniform(k, shape, jnp.float32, -bound, bound)

    ks = jax.random.split(key, 10)
    return {
        "conv1_w": u(ks[0], (6, 3, 5, 5), 3 * 5 * 5),
        "conv1_b": u(ks[1], (6,), 3 * 5 * 5),
        "conv2_w": u(ks[2], (16, 6, 5, 5), 6 * 5 * 5),
        "conv2_b": u(ks[3], (16,), 6 * 5 * 5),
        "fc1_w": u(ks[4], (120, 400), 400),
        "fc1_b": u(ks[5], (120,), 400),
        "fc2_w": u(ks[6], (84, 120), 120),
        "fc2_b": u(ks[7], (84,), 120),
        "fc3_w": u(ks[8], (10, 84), 84),
        "fc3_b": u(ks[9], (10,), 84),
    }


if __name__ == "__main__":
    key = jax.random.PRNGKey(0)
    pkey, xkey = jax.random.split(key)
    params = init_params(pkey)
    packed = pack_params(params)   # one-time packing, outside jit

    # Architecture requires 32x32 spatial input (16*5*5 flatten); keep batch small.
    x = jax.random.normal(xkey, (2, 3, 32, 32), dtype=jnp.float32)

    out = jax.block_until_ready(net_forward(x, packed))
    assert out.shape == (2, 10), out.shape

    ref = reference_forward(x, params)
    assert jnp.allclose(out, ref, atol=1e-3, rtol=1e-3), (
        "mismatch vs reference: max abs err = "
        f"{float(jnp.max(jnp.abs(out - ref)))}")

    print("KERNEL_OK")
</pallas_src>

<mosaic_0001>
module attributes {stable_mosaic.version = 11 : i64} {
  func.func @_conv_relu_pool_kernel(%arg0: i32, %arg1: memref<4x6x108xf32, #tpu.memory_space<vmem>>, %arg2: memref<6x1xf32, #tpu.memory_space<vmem>>, %arg3: memref<108x392xf32, #tpu.memory_space<vmem>>, %arg4: memref<6x392xf32, #tpu.memory_space<vmem>>) attributes {dimension_semantics = [#tpu.dimension_semantics<arbitrary>], iteration_bounds = array<i64: 1>, scalar_prefetch = 0 : i64, scratch_operands = 0 : i64, tpu.core_type = #tpu.core_type<tc>, window_params = [{pipeline_mode = #tpu.pipeline_mode<synchronous>, transform_indices = @transform_0, window_bounds = array<i64: 4, 6, 108>}, {pipeline_mode = #tpu.pipeline_mode<synchronous>, transform_indices = @transform_1, window_bounds = array<i64: 6, 1>}, {pipeline_mode = #tpu.pipeline_mode<synchronous>, transform_indices = @transform_2, window_bounds = array<i64: 108, 392>}, {pipeline_mode = #tpu.pipeline_mode<synchronous>, transform_indices = @transform_3, window_bounds = array<i64: 6, 392>}]} {
    %c0 = arith.constant 0 : index
    %c0_0 = arith.constant 0 : index
    %0 = vector.load %arg3[%c0, %c0_0] : memref<108x392xf32, #tpu.memory_space<vmem>>, vector<108x392xf32>
    %c0_1 = arith.constant 0 : index
    %c0_2 = arith.constant 0 : index
    %c0_3 = arith.constant 0 : index
    %1 = vector.load %arg1[%c0_1, %c0_2, %c0_3] : memref<4x6x108xf32, #tpu.memory_space<vmem>>, vector<1x6x108xf32>
    %2 = vector.shape_cast %1 : vector<1x6x108xf32> to vector<6x108xf32>
    %cst = arith.constant dense<0.000000e+00> : vector<6x392xf32>
    %3 = tpu.matmul %2, %0, %cst {dimension_numbers = #tpu.dot_dimension_numbers<[1], [0], [0], [1], [0, 0, 1, 1], [], []>} : vector<6x108xf32>, vector<108x392xf32>, vector<6x392xf32> -> vector<6x392xf32>
    %c1 = arith.constant 1 : index
    %c0_4 = arith.constant 0 : index
    %c0_5 = arith.constant 0 : index
    %4 = vector.load %arg1[%c1, %c0_4, %c0_5] : memref<4x6x108xf32, #tpu.memory_space<vmem>>, vector<1x6x108xf32>
    %5 = vector.shape_cast %4 : vector<1x6x108xf32> to vector<6x108xf32>
    %cst_6 = arith.constant dense<0.000000e+00> : vector<6x392xf32>
    %6 = tpu.matmul %5, %0, %cst_6 {dimension_numbers = #tpu.dot_dimension_numbers<[1], [0], [0], [1], [0, 0, 1, 1], [], []>} : vector<6x108xf32>, vector<108x392xf32>, vector<6x392xf32> -> vector<6x392xf32>
    %7 = arith.maximumf %3, %6 : vector<6x392xf32>
    %c2 = arith.constant 2 : index
    %c0_7 = arith.constant 0 : index
    %c0_8 = arith.constant 0 : index
    %8 = vector.load %arg1[%c2, %c0_7, %c0_8] : memref<4x6x108xf32, #tpu.memory_space<vmem>>, vector<1x6x108xf32>
    %9 = vector.shape_cast %8 : vector<1x6x108xf32> to vector<6x108xf32>
    %cst_9 = arith.constant dense<0.000000e+00> : vector<6x392xf32>
    %10 = tpu.matmul %9, %0, %cst_9 {dimension_numbers = #tpu.dot_dimension_numbers<[1], [0], [0], [1], [0, 0, 1, 1], [], []>} : vector<6x108xf32>, vector<108x392xf32>, vector<6x392xf32> -> vector<6x392xf32>
    %11 = arith.maximumf %7, %10 : vector<6x392xf32>
    %c3 = arith.constant 3 : index
    %c0_10 = arith.constant 0 : index
    %c0_11 = arith.constant 0 : index
    %12 = vector.load %arg1[%c3, %c0_10, %c0_11] : memref<4x6x108xf32, #tpu.memory_space<vmem>>, vector<1x6x108xf32>
    %13 = vector.shape_cast %12 : vector<1x6x108xf32> to vector<6x108xf32>
    %cst_12 = arith.constant dense<0.000000e+00> : vector<6x392xf32>
    %14 = tpu.matmul %13, %0, %cst_12 {dimension_numbers = #tpu.dot_dimension_numbers<[1], [0], [0], [1], [0, 0, 1, 1], [], []>} : vector<6x108xf32>, vector<108x392xf32>, vector<6x392xf32> -> vector<6x392xf32>
    %15 = arith.maximumf %11, %14 : vector<6x392xf32>
    %c0_13 = arith.constant 0 : index
    %c0_14 = arith.constant 0 : index
    %16 = vector.load %arg2[%c0_13, %c0_14] : memref<6x1xf32, #tpu.memory_space<vmem>>, vector<6x1xf32>
    %17 = vector.broadcast %16 : vector<6x1xf32> to vector<6x392xf32>
    %18 = arith.addf %15, %17 : vector<6x392xf32>
    %cst_15 = arith.constant 0.000000e+00 : f32
    %19 = vector.broadcast %cst_15 : f32 to vector<6x392xf32>
    %20 = arith.maximumf %18, %19 : vector<6x392xf32>
    %c0_16 = arith.constant 0 : index
    %c0_17 = arith.constant 0 : index
    %21 = vector.load %arg4[%c0_16, %c0_17] : memref<6x392xf32, #tpu.memory_space<vmem>>, vector<6x392xf32>
    tpu.vector_store %arg4[%c0_16, %c0_17], %20 {strides = array<i32>} : memref<6x392xf32, #tpu.memory_space<vmem>>, vector<6x392xf32>,
    return
  }
  func.func @transform_0(%arg0: i32) -> (i32, i32, i32) {
    %c0_i32 = arith.constant 0 : i32
    %c0_i32_0 = arith.constant 0 : i32
    %c0_i32_1 = arith.constant 0 : i32
    %c0_i32_2 = arith.constant 0 : i32
    return %c0_i32, %c0_i32_0, %c0_i32_1 : i32, i32, i32
  }
  func.func @transform_1(%arg0: i32) -> (i32, i32) {
    %c0_i32 = arith.constant 0 : i32
    %c0_i32_0 = arith.constant 0 : i32
    %c0_i32_1 = arith.constant 0 : i32
    return %c0_i32, %c0_i32_0 : i32, i32
  }
  func.func @transform_2(%arg0: i32) -> (i32, i32) {
    %c0_i32 = arith.constant 0 : i32
    %c0_i32_0 = arith.constant 0 : i32
    %c0_i32_1 = arith.constant 0 : i32
    return %c0_i32, %c0_i32_0 : i32, i32
  }
  func.func @transform_3(%arg0: i32) -> (i32, i32) {
    %c0_i32 = arith.constant 0 : i32
    %c0_i32_0 = arith.constant 0 : i32
    %c0_i32_1 = arith.constant 0 : i32
    return %c0_i32, %c0_i32_0 : i32, i32
  }
}

module attributes {stable_mosaic.version = 11 : i64} {
  func.func @_conv_relu_pool_kernel(%arg0: i32, %arg1: memref<4x16x216xf32, #tpu.memory_space<vmem>>, %arg2: memref<16x1xf32, #tpu.memory_space<vmem>>, %arg3: memref<216x50xf32, #tpu.memory_space<vmem>>, %arg4: memref<16x50xf32, #tpu.memory_space<vmem>>) attributes {dimension_semantics = [#tpu.dimension_semantics<arbitrary>], iteration_bounds = array<i64: 1>, scalar_prefetch = 0 : i64, scratch_operands = 0 : i64, tpu.core_type = #tpu.core_type<tc>, window_params = [{pipeline_mode = #tpu.pipeline_mode<synchronous>, transform_indices = @transform_0, window_bounds = array<i64: 4, 16, 216>}, {pipeline_mode = #tpu.pipeline_mode<synchronous>, transform_indices = @transform_1, window_bounds = array<i64: 16, 1>}, {pipeline_mode = #tpu.pipeline_mode<synchronous>, transform_indices = @transform_2, window_bounds = array<i64: 216, 50>}, {pipeline_mode = #tpu.pipeline_mode<synchronous>, transform_indices = @transform_3, window_bounds = array<i64: 16, 50>}]} {
    %c0 = arith.constant 0 : index
    %c0_0 = arith.constant 0 : index
    %0 = vector.load %arg3[%c0, %c0_0] : memref<216x50xf32, #tpu.memory_space<vmem>>, vector<216x50xf32>
    %c0_1 = arith.constant 0 : index
    %c0_2 = arith.constant 0 : index
    %c0_3 = arith.constant 0 : index
    %1 = vector.load %arg1[%c0_1, %c0_2, %c0_3] : memref<4x16x216xf32, #tpu.memory_space<vmem>>, vector<1x16x216xf32>
    %2 = vector.shape_cast %1 : vector<1x16x216xf32> to vector<16x216xf32>
    %cst = arith.constant dense<0.000000e+00> : vector<16x50xf32>
    %3 = tpu.matmul %2, %0, %cst {dimension_numbers = #tpu.dot_dimension_numbers<[1], [0], [0], [1], [0, 0, 1, 1], [], []>} : vector<16x216xf32>, vector<216x50xf32>, vector<16x50xf32> -> vector<16x50xf32>
    %c1 = arith.constant 1 : index
    %c0_4 = arith.constant 0 : index
    %c0_5 = arith.constant 0 : index
    %4 = vector.load %arg1[%c1, %c0_4, %c0_5] : memref<4x16x216xf32, #tpu.memory_space<vmem>>, vector<1x16x216xf32>
    %5 = vector.shape_cast %4 : vector<1x16x216xf32> to vector<16x216xf32>
    %cst_6 = arith.constant dense<0.000000e+00> : vector<16x50xf32>
    %6 = tpu.matmul %5, %0, %cst_6 {dimension_numbers = #tpu.dot_dimension_numbers<[1], [0], [0], [1], [0, 0, 1, 1], [], []>} : vector<16x216xf32>, vector<216x50xf32>, vector<16x50xf32> -> vector<16x50xf32>
    %7 = arith.maximumf %3, %6 : vector<16x50xf32>
    %c2 = arith.constant 2 : index
    %c0_7 = arith.constant 0 : index
    %c0_8 = arith.constant 0 : index
    %8 = vector.load %arg1[%c2, %c0_7, %c0_8] : memref<4x16x216xf32, #tpu.memory_space<vmem>>, vector<1x16x216xf32>
    %9 = vector.shape_cast %8 : vector<1x16x216xf32> to vector<16x216xf32>
    %cst_9 = arith.constant dense<0.000000e+00> : vector<16x50xf32>
    %10 = tpu.matmul %9, %0, %cst_9 {dimension_numbers = #tpu.dot_dimension_numbers<[1], [0], [0], [1], [0, 0, 1, 1], [], []>} : vector<16x216xf32>, vector<216x50xf32>, vector<16x50xf32> -> vector<16x50xf32>
    %11 = arith.maximumf %7, %10 : vector<16x50xf32>
    %c3 = arith.constant 3 : index
    %c0_10 = arith.constant 0 : index
    %c0_11 = arith.constant 0 : index
    %12 = vector.load %arg1[%c3, %c0_10, %c0_11] : memref<4x16x216xf32, #tpu.memory_space<vmem>>, vector<1x16x216xf32>
    %13 = vector.shape_cast %12 : vector<1x16x216xf32> to vector<16x216xf32>
    %cst_12 = arith.constant dense<0.000000e+00> : vector<16x50xf32>
    %14 = tpu.matmul %13, %0, %cst_12 {dimension_numbers = #tpu.dot_dimension_numbers<[1], [0], [0], [1], [0, 0, 1, 1], [], []>} : vector<16x216xf32>, vector<216x50xf32>, vector<16x50xf32> -> vector<16x50xf32>
    %15 = arith.maximumf %11, %14 : vector<16x50xf32>
    %c0_13 = arith.constant 0 : index
    %c0_14 = arith.constant 0 : index
    %16 = vector.load %arg2[%c0_13, %c0_14] : memref<16x1xf32, #tpu.memory_space<vmem>>, vector<16x1xf32>
    %17 = vector.broadcast %16 : vector<16x1xf32> to vector<16x50xf32>
    %18 = arith.addf %15, %17 : vector<16x50xf32>
    %cst_15 = arith.constant 0.000000e+00 : f32
    %19 = vector.broadcast %cst_15 : f32 to vector<16x50xf32>
    %20 = arith.maximumf %18, %19 : vector<16x50xf32>
    %c0_16 = arith.constant 0 : index
    %c0_17 = arith.constant 0 : index
    %21 = vector.load %arg4[%c0_16, %c0_17] : memref<16x50xf32, #tpu.memory_space<vmem>>, vector<16x50xf32>
    tpu.vector_store %arg4[%c0_16, %c0_17], %20 {strides = array<i32>} : memref<16x50xf32, #tpu.memory_space<vmem>>, vector<16x50xf32>,
    return
  }
  func.func @transform_0(%arg0: i32) -> (i32, i32, i32) {
    %c0_i32 = arith.constant 0 : i32
    %c0_i32_0 = arith.constant 0 : i32
    %c0_i32_1 = arith.constant 0 : i32
    %c0_i32_2 = arith.constant 0 : i32
    return %c0_i32, %c0_i32_0, %c0_i32_1 : i32, i32, i32
  }
  func.func @transform_1(%arg0: i32) -> (i32, i32) {
    %c0_i32 = arith.constant 0 : i32
    %c0_i32_0 = arith.constant 0 : i32
    %c0_i32_1 = arith.constant 0 : i32
    return %c0_i32, %c0_i32_0 : i32, i32
  }
  func.func @transform_2(%arg0: i32) -> (i32, i32) {
    %c0_i32 = arith.constant 0 : i32
    %c0_i32_0 = arith.constant 0 : i32
    %c0_i32_1 = arith.constant 0 : i32
    return %c0_i32, %c0_i32_0 : i32, i32
  }
  func.func @transform_3(%arg0: i32) -> (i32, i32) {
    %c0_i32 = arith.constant 0 : i32
    %c0_i32_0 = arith.constant 0 : i32
    %c0_i32_1 = arith.constant 0 : i32
    return %c0_i32, %c0_i32_0 : i32, i32
  }
}

module attributes {stable_mosaic.version = 11 : i64} {
  func.func @_mlp3_kernel(%arg0: i32, %arg1: memref<2x400xf32, #tpu.memory_space<vmem>>, %arg2: memref<400x120xf32, #tpu.memory_space<vmem>>, %arg3: memref<1x120xf32, #tpu.memory_space<vmem>>, %arg4: memref<120x84xf32, #tpu.memory_space<vmem>>, %arg5: memref<1x84xf32, #tpu.memory_space<vmem>>, %arg6: memref<84x10xf32, #tpu.memory_space<vmem>>, %arg7: memref<1x10xf32, #tpu.memory_space<vmem>>, %arg8: memref<2x10xf32, #tpu.memory_space<vmem>>) attributes {dimension_semantics = [#tpu.dimension_semantics<arbitrary>], iteration_bounds = array<i64: 1>, scalar_prefetch = 0 : i64, scratch_operands = 0 : i64, tpu.core_type = #tpu.core_type<tc>, window_params = [{pipeline_mode = #tpu.pipeline_mode<synchronous>, transform_indices = @transform_0, window_bounds = array<i64: 2, 400>}, {pipeline_mode = #tpu.pipeline_mode<synchronous>, transform_indices = @transform_1, window_bounds = array<i64: 400, 120>}, {pipeline_mode = #tpu.pipeline_mode<synchronous>, transform_indices = @transform_2, window_bounds = array<i64: 1, 120>}, {pipeline_mode = #tpu.pipeline_mode<synchronous>, transform_indices = @transform_3, window_bounds = array<i64: 120, 84>}, {pipeline_mode = #tpu.pipeline_mode<synchronous>, transform_indices = @transform_4, window_bounds = array<i64: 1, 84>}, {pipeline_mode = #tpu.pipeline_mode<synchronous>, transform_indices = @transform_5, window_bounds = array<i64: 84, 10>}, {pipeline_mode = #tpu.pipeline_mode<synchronous>, transform_indices = @transform_6, window_bounds = array<i64: 1, 10>}, {pipeline_mode = #tpu.pipeline_mode<synchronous>, transform_indices = @transform_7, window_bounds = array<i64: 2, 10>}]} {
    %c0 = arith.constant 0 : index
    %c0_0 = arith.constant 0 : index
    %0 = vector.load %arg1[%c0, %c0_0] : memref<2x400xf32, #tpu.memory_space<vmem>>, vector<2x400xf32>
    %c0_1 = arith.constant 0 : index
    %c0_2 = arith.constant 0 : index
    %1 = vector.load %arg2[%c0_1, %c0_2] : memref<400x120xf32, #tpu.memory_space<vmem>>, vector<400x120xf32>
    %cst = arith.constant dense<0.000000e+00> : vector<2x120xf32>
    %2 = tpu.matmul %0, %1, %cst {dimension_numbers = #tpu.dot_dimension_numbers<[1], [0], [0], [1], [0, 0, 1, 1], [], []>} : vector<2x400xf32>, vector<400x120xf32>, vector<2x120xf32> -> vector<2x120xf32>
    %c0_3 = arith.constant 0 : index
    %c0_4 = arith.constant 0 : index
    %3 = vector.load %arg3[%c0_3, %c0_4] : memref<1x120xf32, #tpu.memory_space<vmem>>, vector<1x120xf32>
    %4 = vector.broadcast %3 : vector<1x120xf32> to vector<2x120xf32>
    %5 = arith.addf %2, %4 : vector<2x120xf32>
    %cst_5 = arith.constant 0.000000e+00 : f32
    %6 = vector.broadcast %cst_5 : f32 to vector<2x120xf32>
    %7 = arith.maximumf %5, %6 : vector<2x120xf32>
    %c0_6 = arith.constant 0 : index
    %c0_7 = arith.constant 0 : index
    %8 = vector.load %arg4[%c0_6, %c0_7] : memref<120x84xf32, #tpu.memory_space<vmem>>, vector<120x84xf32>
    %cst_8 = arith.constant dense<0.000000e+00> : vector<2x84xf32>
    %9 = tpu.matmul %7, %8, %cst_8 {dimension_numbers = #tpu.dot_dimension_numbers<[1], [0], [0], [1], [0, 0, 1, 1], [], []>} : vector<2x120xf32>, vector<120x84xf32>, vector<2x84xf32> -> vector<2x84xf32>
    %c0_9 = arith.constant 0 : index
    %c0_10 = arith.constant 0 : index
    %10 = vector.load %arg5[%c0_9, %c0_10] : memref<1x84xf32, #tpu.memory_space<vmem>>, vector<1x84xf32>
    %11 = vector.broadcast %10 : vector<1x84xf32> to vector<2x84xf32>
    %12 = arith.addf %9, %11 : vector<2x84xf32>
    %cst_11 = arith.constant 0.000000e+00 : f32
    %13 = vector.broadcast %cst_11 : f32 to vector<2x84xf32>
    %14 = arith.maximumf %12, %13 : vector<2x84xf32>
    %c0_12 = arith.constant 0 : index
    %c0_13 = arith.constant 0 : index
    %15 = vector.load %arg6[%c0_12, %c0_13] : memref<84x10xf32, #tpu.memory_space<vmem>>, vector<84x10xf32>
    %cst_14 = arith.constant dense<0.000000e+00> : vector<2x10xf32>
    %16 = tpu.matmul %14, %15, %cst_14 {dimension_numbers = #tpu.dot_dimension_numbers<[1], [0], [0], [1], [0, 0, 1, 1], [], []>} : vector<2x84xf32>, vector<84x10xf32>, vector<2x10xf32> -> vector<2x10xf32>
    %c0_15 = arith.constant 0 : index
    %c0_16 = arith.constant 0 : index
    %17 = vector.load %arg7[%c0_15, %c0_16] : memref<1x10xf32, #tpu.memory_space<vmem>>, vector<1x10xf32>
    %18 = vector.broadcast %17 : vector<1x10xf32> to vector<2x10xf32>
    %19 = arith.addf %16, %18 : vector<2x10xf32>
    %c0_17 = arith.constant 0 : index
    %c0_18 = arith.constant 0 : index
    %20 = vector.load %arg8[%c0_17, %c0_18] : memref<2x10xf32, #tpu.memory_space<vmem>>, vector<2x10xf32>
    tpu.vector_store %arg8[%c0_17, %c0_18], %19 {strides = array<i32>} : memref<2x10xf32, #tpu.memory_space<vmem>>, vector<2x10xf32>,
    return
  }
  func.func @transform_0(%arg0: i32) -> (i32, i32) {
    %c0_i32 = arith.constant 0 : i32
    %c0_i32_0 = arith.constant 0 : i32
    %c0_i32_1 = arith.constant 0 : i32
    return %c0_i32, %c0_i32_0 : i32, i32
  }
  func.func @transform_1(%arg0: i32) -> (i32, i32) {
    %c0_i32 = arith.constant 0 : i32
    %c0_i32_0 = arith.constant 0 : i32
    %c0_i32_1 = arith.constant 0 : i32
    return %c0_i32, %c0_i32_0 : i32, i32
  }
  func.func @transform_2(%arg0: i32) -> (i32, i32) {
    %c0_i32 = arith.constant 0 : i32
    %c0_i32_0 = arith.constant 0 : i32
    %c0_i32_1 = arith.constant 0 : i32
    return %c0_i32, %c0_i32_0 : i32, i32
  }
  func.func @transform_3(%arg0: i32) -> (i32, i32) {
    %c0_i32 = arith.constant 0 : i32
    %c0_i32_0 = arith.constant 0 : i32
    %c0_i32_1 = arith.constant 0 : i32
    return %c0_i32, %c0_i32_0 : i32, i32
  }
  func.func @transform_4(%arg0: i32) -> (i32, i32) {
    %c0_i32 = arith.constant 0 : i32
    %c0_i32_0 = arith.constant 0 : i32
    %c0_i32_1 = arith.constant 0 : i32
    return %c0_i32, %c0_i32_0 : i32, i32
  }
  func.func @transform_5(%arg0: i32) -> (i32, i32) {
    %c0_i32 = arith.constant 0 : i32
    %c0_i32_0 = arith.constant 0 : i32
    %c0_i32_1 = arith.constant 0 : i32
    return %c0_i32, %c0_i32_0 : i32, i32
  }
  func.func @transform_6(%arg0: i32) -> (i32, i32) {
    %c0_i32 = arith.constant 0 : i32
    %c0_i32_0 = arith.constant 0 : i32
    %c0_i32_1 = arith.constant 0 : i32
    return %c0_i32, %c0_i32_0 : i32, i32
  }
  func.func @transform_7(%arg0: i32) -> (i32, i32) {
    %c0_i32 = arith.constant 0 : i32
    %c0_i32_0 = arith.constant 0 : i32
    %c0_i32_1 = arith.constant 0 : i32
    return %c0_i32, %c0_i32_0 : i32, i32
  }
}

</mosaic_0001>

<llo_original>
// kernel: net_forward.3
$region0: #{net_forward.3}
  #allocation0 [shape = 'u32[]', space=smem, size = 0x4, offset = 0x4, fixed_abs, tag = 'smem constant byte address 0x4 - core index']
  #allocation1 [shape = 'u32[144,128]{1,0:T(1,128)}', space=vmem, size = 0x12000, scoped, tag = 'internal scratch']
  %s0 = inlined_call_operand.vmem [shape: f32[4,6,108], index: 0, kind: input, shape index: {}]
  %s1 = inlined_call_operand.vmem [shape: f32[6,1], index: 1, kind: input, shape index: {}]
  %s2 = inlined_call_operand.vmem [shape: f32[108,392], index: 2, kind: input, shape index: {}]
  %s3 = inlined_call_operand.vmem [shape: f32[6,392], index: 3, kind: output, shape index: {}]
  %s4 = sld [smem:[#allocation0]]
  $region22: #{net_forward.3} parent=0
    _
  %s6 = ssub.s32 1, %s4
  %s7 = scalar_select 0, %s6, %s4
  // Predicated region
  $region2: #{net_forward.3} parent=0 // pred_check
    _
  $region3: #{net_forward.3} parent=0 // pred_check_branch
    %9 = sbr.rel (0) target = $region5
  $region4: #{net_forward.3} parent=0 // pred_region
    _
  $region5: #{net_forward.3} parent=0 // pred_fallthru
    _
  // Predicated region
  $region6: #{net_forward.3} parent=0 // pred_check
    _
  $region7: #{net_forward.3} parent=0 // pred_check_branch
    %11 = sbr.rel (0) target = $region9
  $region8: #{net_forward.3} parent=0 // pred_region
    _
  $region9: #{net_forward.3} parent=0 // pred_fallthru
    _
  // Predicated region
  $region10: #{net_forward.3} parent=0 // pred_check
    _
  $region11: #{net_forward.3} parent=0 // pred_check_branch
    %13 = sbr.rel (0) target = $region13
  $region12: #{net_forward.3} parent=0 // pred_region
    _
  $region13: #{net_forward.3} parent=0 // pred_fallthru
    _
  %v14 = vld [vmem:[%s2] sm:$0xff]
  %v15 = vld [vmem:[%s2 + $0x8] sm:$0xff]
  %v16 = vld [vmem:[%s2 + $0x10] sm:$0xff]
  %v17 = vld [vmem:[%s2 + $0x18] sm:$0xff]
  %v18 = vld [vmem:[%s2 + $0x20] sm:$0xff]
  %v19 = vld [vmem:[%s2 + $0x28] sm:$0xff]
  %v20 = vld [vmem:[%s2 + $0x30] sm:$0xff]
  %v21 = vld [vmem:[%s2 + $0x38] sm:$0xff]
  %v22 = vld [vmem:[%s2 + $0x40] sm:$0xff]
  %v23 = vld [vmem:[%s2 + $0x48] sm:$0xff]
  %v24 = vld [vmem:[%s2 + $0x50] sm:$0xff]
  %v25 = vld [vmem:[%s2 + $0x58] sm:$0xff]
  %v26 = vld [vmem:[%s2 + $0x60] sm:$0xff]
  %v27 = vld [vmem:[%s2 + $0x68] sm:$0xff]
  %v28 = vld [vmem:[%s2 + $0x70] sm:$0xff]
  %v29 = vld [vmem:[%s2 + $0x78] sm:$0xff]
  %v30 = vld [vmem:[%s2 + $0x80] sm:$0xff]
  %v31 = vld [vmem:[%s2 + $0x88] sm:$0xff]
  %v32 = vld [vmem:[%s2 + $0x90] sm:$0xff]
  %v33 = vld [vmem:[%s2 + $0x98] sm:$0xff]
  %v34 = vld [vmem:[%s2 + $0xa0] sm:$0xff]
  %v35 = vld [vmem:[%s2 + $0xa8] sm:$0xff]
  %v36 = vld [vmem:[%s2 + $0xb0] sm:$0xff]
  %v37 = vld [vmem:[%s2 + $0xb8] sm:$0xff]
  %v38 = vld [vmem:[%s2 + $0xc0] sm:$0xff]
  %v39 = vld [vmem:[%s2 + $0xc8] sm:$0xff]
  %v40 = vld [vmem:[%s2 + $0xd0] sm:$0xff]
  %v41 = vld [vmem:[%s2 + $0xd8] sm:$0xff]
  %v42 = vld [vmem:[%s2 + $0xe0] sm:$0xff]
  %v43 = vld [vmem:[%s2 + $0xe8] sm:$0xff]
  %v44 = vld [vmem:[%s2 + $0xf0] sm:$0xff]
  %v45 = vld [vmem:[%s2 + $0xf8] sm:$0xff]
  %v46 = vld [vmem:[%s2 + $0x100] sm:$0xff]
  %v47 = vld [vmem:[%s2 + $0x108] sm:$0xff]
  %v48 = vld [vmem:[%s2 + $0x110] sm:$0xff]
  %v49 = vld [vmem:[%s2 + $0x118] sm:$0xff]
  %v50 = vld [vmem:[%s2 + $0x120] sm:$0xff]
  %v51 = vld [vmem:[%s2 + $0x128] sm:$0xff]
  %v52 = vld [vmem:[%s2 + $0x130] sm:$0xff]
  %v53 = vld [vmem:[%s2 + $0x138] sm:$0xff]
  %v54 = vld [vmem:[%s2 + $0x140] sm:$0xff]
  %v55 = vld [vmem:[%s2 + $0x148] sm:$0xff]
  %v56 = vld [vmem:[%s2 + $0x150] sm:$0xff]
  %v57 = vld [vmem:[%s2 + $0x158] sm:$0xff]
  %v58 = vld [vmem:[%s2 + $0x160] sm:$0xff]
  %v59 = vld [vmem:[%s2 + $0x168] sm:$0xff]
  %v60 = vld [vmem:[%s2 + $0x170] sm:$0xff]
  %v61 = vld [vmem:[%s2 + $0x178] sm:$0xff]
  %v62 = vld [vmem:[%s2 + $0x180] sm:$0xff]
  %v63 = vld [vmem:[%s2 + $0x188] sm:$0xff]
  %v64 = vld [vmem:[%s2 + $0x190] sm:$0xff]
  %v65 = vld [vmem:[%s2 + $0x198] sm:$0xff]
  %v66 = vld [vmem:[%s2 + $0x1a0] sm:$0xf]
  %v67 = vld [vmem:[%s2 + $0x1a8] sm:$0xf]
  %v68 = vld [vmem:[%s2 + $0x1b0] sm:$0xf]
  %v69 = vld [vmem:[%s2 + $0x1b8] sm:$0xf]
  %v70 = vld [vmem:[%s0] sm:$0x3f]
  %vm71 = vcmask 883712
  %v73 = vsel %vm71, %v70, 0
  %vm75 = vcmask 1043456
  %v77 = vsel %vm75, %v66, 0
  %v80 = vsel %vm75, %v67, 0
  %v83 = vsel %vm75, %v68, 0
  %v86 = vsel %vm75, %v69, 0
  %88 = vmatprep.subr.mxu0 0.0
  %89 = vmatpush1.msra.mxu0 0.0
  %90 = vmatprep.subr.mxu0 0.0
  %91 = vmatpush1.msra.mxu0 0.0
  %92 = vmatprep.subr.mxu0 %v80
  %93 = vmatpush1.msra.mxu0 %v77
  %94 = vmatprep.subr.mxu0 %v63
  %95 = vmatpush1.msra.mxu0 %v62
  %96 = vmatprep.subr.mxu0 %v59
  %97 = vmatpush1.msra.mxu0 %v58
  %98 = vmatprep.subr.mxu0 %v55
  %99 = vmatpush1.msra.mxu0 %v54
  %100 = vmatprep.subr.mxu0 %v51
  %101 = vmatpush1.msra.mxu0 %v50
  %102 = vmatprep.subr.mxu0 %v47
  %103 = vmatpush1.msra.mxu0 %v46
  %104 = vmatprep.subr.mxu0 %v43
  %105 = vmatpush1.msra.mxu0 %v42
  %106 = vmatprep.subr.mxu0 %v39
  %107 = vmatpush1.msra.mxu0 %v38
  %108 = vmatprep.subr.mxu0 %v35
  %109 = vmatpush1.msra.mxu0 %v34
  %110 = vmatprep.subr.mxu0 %v31
  %111 = vmatpush1.msra.mxu0 %v30
  %112 = vmatprep.subr.mxu0 %v27
  %113 = vmatpush1.msra.mxu0 %v26
  %114 = vmatprep.subr.mxu0 %v23
  %115 = vmatpush1.msra.mxu0 %v22
  %116 = vmatprep.subr.mxu0 %v19
  %117 = vmatpush1.msra.mxu0 %v18
  %118 = vmatprep.subr.mxu0 %v15
  %119 = vmatpush1.msra.mxu0 %v14
  %120 = vmatprep.subr.mxu0 0.0
  %121 = vmatpush2.msra.mxu0 0.0
  %122 = vmatprep.subr.mxu0 0.0
  %123 = vmatpush2.msra.mxu0 0.0
  %124 = vmatprep.subr.mxu0 0.0
  %125 = vmatpush2.msra.mxu0 0.0
  %126 = vmatprep.subr.mxu0 0.0
  %127 = vmatpush2.msra.mxu0 0.0
  %128 = vmatprep.subr.mxu0 0.0
  %129 = vmatpush2.msra.mxu0 0.0
  %130 = vmatprep.subr.mxu0 0.0
  %131 = vmatpush2.msra.mxu0 0.0
  %132 = vmatprep.subr.mxu0 0.0
  %133 = vmatpush2.msra.mxu0 0.0
  %134 = vmatprep.subr.mxu0 0.0
  %135 = vmatpush2.msra.mxu0 0.0
  %136 = vmatprep.subr.mxu0 0.0
  %137 = vmatpush2.msra.mxu0 0.0
  %138 = vmatprep.subr.mxu0 0.0
  %139 = vmatpush2.msra.mxu0 0.0
  %140 = vmatprep.subr.mxu0 0.0
  %141 = vmatpush2.msra.mxu0 0.0
  %142 = vmatprep.subr.mxu0 0.0
  %143 = vmatpush2.msra.mxu0 0.0
  %144 = vmatprep.subr.mxu0 0.0
  %145 = vmatpush2.msra.mxu0 0.0
  %146 = vmatprep.subr.mxu0 0.0
  %147 = vmatpush2.msra.mxu0 0.0
  %148 = vmatprep.subr.mxu0 0.0
  %149 = vmatpush2.msra.mxu0 0.0
  %150 = vmatprep.subr.mxu0 0.0
  %151 = vmatpush2.msra.mxu0 0.0
  %152 = vmatprep.mubr.f32.mxu0 0.0
  %153 = vmatmul.mubr.f32.gmra.mxu0 %v73
  %v154 = vpop.f32.mrf.mxu0
  %v155 = vadd.f32 0.0, %v154
  %v156 = vpop.f32.mrf.mxu0
  %v157 = vadd.f32 0.0, %v156
  %158 = vdwg.mxu0
  %159 = vmatprep.subr.mxu0 0.0
  %160 = vmatpush1.msra.mxu0 0.0
  %161 = vmatprep.subr.mxu0 0.0
  %162 = vmatpush1.msra.mxu0 0.0
  %163 = vmatprep.subr.mxu0 %v86
  %164 = vmatpush1.msra.mxu0 %v83
  %165 = vmatprep.subr.mxu0 %v65
  %166 = vmatpush1.msra.mxu0 %v64
  %167 = vmatprep.subr.mxu0 %v61
  %168 = vmatpush1.msra.mxu0 %v60
  %169 = vmatprep.subr.mxu0 %v57
  %170 = vmatpush1.msra.mxu0 %v56
  %171 = vmatprep.subr.mxu0 %v53
  %172 = vmatpush1.msra.mxu0 %v52
  %173 = vmatprep.subr.mxu0 %v49
  %174 = vmatpush1.msra.mxu0 %v48
  %175 = vmatprep.subr.mxu0 %v45
  %176 = vmatpush1.msra.mxu0 %v44
  %177 = vmatprep.subr.mxu0 %v41
  %178 = vmatpush1.msra.mxu0 %v40
  %179 = vmatprep.subr.mxu0 %v37
  %180 = vmatpush1.msra.mxu0 %v36
  %181 = vmatprep.subr.mxu0 %v33
  %182 = vmatpush1.msra.mxu0 %v32
  %183 = vmatprep.subr.mxu0 %v29
  %184 = vmatpush1.msra.mxu0 %v28
  %185 = vmatprep.subr.mxu0 %v25
  %186 = vmatpush1.msra.mxu0 %v24
  %187 = vmatprep.subr.mxu0 %v21
  %188 = vmatpush1.msra.mxu0 %v20
  %189 = vmatprep.subr.mxu0 %v17
  %190 = vmatpush1.msra.mxu0 %v16
  %191 = vmatprep.subr.mxu0 0.0
  %192 = vmatpush2.msra.mxu0 0.0
  %193 = vmatprep.subr.mxu0 0.0
  %194 = vmatpush2.msra.mxu0 0.0
  %195 = vmatprep.subr.mxu0 0.0
  %196 = vmatpush2.msra.mxu0 0.0
  %197 = vmatprep.subr.mxu0 0.0
  %198 = vmatpush2.msra.mxu0 0.0
  %199 = vmatprep.subr.mxu0 0.0
  %200 = vmatpush2.msra.mxu0 0.0
  %201 = vmatprep.subr.mxu0 0.0
  %202 = vmatpush2.msra.mxu0 0.0
  %203 = vmatprep.subr.mxu0 0.0
  %204 = vmatpush2.msra.mxu0 0.0
  %205 = vmatprep.subr.mxu0 0.0
  %206 = vmatpush2.msra.mxu0 0.0
  %207 = vmatprep.subr.mxu0 0.0
  %208 = vmatpush2.msra.mxu0 0.0
  %209 = vmatprep.subr.mxu0 0.0
  %210 = vmatpush2.msra.mxu0 0.0
  %211 = vmatprep.subr.mxu0 0.0
  %212 = vmatpush2.msra.mxu0 0.0
  %213 = vmatprep.subr.mxu0 0.0
  %214 = vmatpush2.msra.mxu0 0.0
  %215 = vmatprep.subr.mxu0 0.0
  %216 = vmatpush2.msra.mxu0 0.0
  %217 = vmatprep.subr.mxu0 0.0
  %218 = vmatpush2.msra.mxu0 0.0
  %219 = vmatprep.subr.mxu0 0.0
  %220 = vmatpush2.msra.mxu0 0.0
  %221 = vmatprep.subr.mxu0 0.0
  %222 = vmatpush2.msra.mxu0 0.0
  %223 = vmatprep.mubr.f32.mxu0 0.0
  %224 = vmatmul.mubr.f32.gmra.mxu0 %v73
  %v225 = vpop.f32.mrf.mxu0
  %v226 = vadd.f32 0.0, %v225
  %v227 = vpop.f32.mrf.mxu0
  %v228 = vadd.f32 0.0, %v227
  %229 = vdwg.mxu0
  %s230 = scalar_lea.vmem %s0, 8
  %v231 = vld [vmem:[%s230] sm:$0x3f]
  %v233 = vsel %vm71, %v231, 0
  %235 = vmatprep.subr.mxu0 0.0
  %236 = vmatpush1.msra.mxu0 0.0
  %237 = vmatprep.subr.mxu0 0.0
  %238 = vmatpush1.msra.mxu0 0.0
  %239 = vmatprep.subr.mxu0 %v80
  %240 = vmatpush1.msra.mxu0 %v77
  %241 = vmatprep.subr.mxu0 %v63
  %242 = vmatpush1.msra.mxu0 %v62
  %243 = vmatprep.subr.mxu0 %v59
  %244 = vmatpush1.msra.mxu0 %v58
  %245 = vmatprep.subr.mxu0 %v55
  %246 = vmatpush1.msra.mxu0 %v54
  %247 = vmatprep.subr.mxu0 %v51
  %248 = vmatpush1.msra.mxu0 %v50
  %249 = vmatprep.subr.mxu0 %v47
  %250 = vmatpush1.msra.mxu0 %v46
  %251 = vmatprep.subr.mxu0 %v43
  %252 = vmatpush1.msra.mxu0 %v42
  %253 = vmatprep.subr.mxu0 %v39
  %254 = vmatpush1.msra.mxu0 %v38
  %255 = vmatprep.subr.mxu0 %v35
  %256 = vmatpush1.msra.mxu0 %v34
  %257 = vmatprep.subr.mxu0 %v31
  %258 = vmatpush1.msra.mxu0 %v30
  %259 = vmatprep.subr.mxu0 %v27
  %260 = vmatpush1.msra.mxu0 %v26
  %261 = vmatprep.subr.mxu0 %v23
  %262 = vmatpush1.msra.mxu0 %v22
  %263 = vmatprep.subr.mxu0 %v19
  %264 = vmatpush1.msra.mxu0 %v18
  %265 = vmatprep.subr.mxu0 %v15
  %266 = vmatpush1.msra.mxu0 %v14
  %267 = vmatprep.subr.mxu0 0.0
  %268 = vmatpush2.msra.mxu0 0.0
  %269 = vmatprep.subr.mxu0 0.0
  %270 = vmatpush2.msra.mxu0 0.0
  %271 = vmatprep.subr.mxu0 0.0
  %272 = vmatpush2.msra.mxu0 0.0
  %273 = vmatprep.subr.mxu0 0.0
  %274 = vmatpush2.msra.mxu0 0.0
  %275 = vmatprep.subr.mxu0 0.0
  %276 = vmatpush2.msra.mxu0 0.0
  %277 = vmatprep.subr.mxu0 0.0
  %278 = vmatpush2.msra.mxu0 0.0
  %279 = vmatprep.subr.mxu0 0.0
  %280 = vmatpush2.msra.mxu0 0.0
  %281 = vmatprep.subr.mxu0 0.0
  %282 = vmatpush2.msra.mxu0 0.0
  %283 = vmatprep.subr.mxu0 0.0
  %284 = vmatpush2.msra.mxu0 0.0
  %285 = vmatprep.subr.mxu0 0.0
  %286 = vmatpush2.msra.mxu0 0.0
  %287 = vmatprep.subr.mxu0 0.0
  %288 = vmatpush2.msra.mxu0 0.0
  %289 = vmatprep.subr.mxu0 0.0
  %290 = vmatpush2.msra.mxu0 0.0
  %291 = vmatprep.subr.mxu0 0.0
  %292 = vmatpush2.msra.mxu0 0.0
  %293 = vmatprep.subr.mxu0 0.0
  %294 = vmatpush2.msra.mxu0 0.0
  %295 = vmatprep.subr.mxu0 0.0
  %296 = vmatpush2.msra.mxu0 0.0
  %297 = vmatprep.subr.mxu0 0.0
  %298 = vmatpush2.msra.mxu0 0.0
  %299 = vmatprep.mubr.f32.mxu0 0.0
  %300 = vmatmul.mubr.f32.gmra.mxu0 %v233
  %v301 = vpop.f32.mrf.mxu0
  %v302 = vadd.f32 0.0, %v301
  %v303 = vpop.f32.mrf.mxu0
  %v304 = vadd.f32 0.0, %v303
  %305 = vdwg.mxu0
  %306 = vmatprep.subr.mxu0 0.0
  %307 = vmatpush1.msra.mxu0 0.0
  %308 = vmatprep.subr.mxu0 0.0
  %309 = vmatpush1.msra.mxu0 0.0
  %310 = vmatprep.subr.mxu0 %v86
  %311 = vmatpush1.msra.mxu0 %v83
  %312 = vmatprep.subr.mxu0 %v65
  %313 = vmatpush1.msra.mxu0 %v64
  %314 = vmatprep.subr.mxu0 %v61
  %315 = vmatpush1.msra.mxu0 %v60
  %316 = vmatprep.subr.mxu0 %v57
  %317 = vmatpush1.msra.mxu0 %v56
  %318 = vmatprep.subr.mxu0 %v53
  %319 = vmatpush1.msra.mxu0 %v52
  %320 = vmatprep.subr.mxu0 %v49
  %321 = vmatpush1.msra.mxu0 %v48
  %322 = vmatprep.subr.mxu0 %v45
  %323 = vmatpush1.msra.mxu0 %v44
  %324 = vmatprep.subr.mxu0 %v41
  %325 = vmatpush1.msra.mxu0 %v40
  %326 = vmatprep.subr.mxu0 %v37
  %327 = vmatpush1.msra.mxu0 %v36
  %328 = vmatprep.subr.mxu0 %v33
  %329 = vmatpush1.msra.mxu0 %v32
  %330 = vmatprep.subr.mxu0 %v29
  %331 = vmatpush1.msra.mxu0 %v28
  %332 = vmatprep.subr.mxu0 %v25
  %333 = vmatpush1.msra.mxu0 %v24
  %334 = vmatprep.subr.mxu0 %v21
  %335 = vmatpush1.msra.mxu0 %v20
  %336 = vmatprep.subr.mxu0 %v17
  %337 = vmatpush1.msra.mxu0 %v16
  %338 = vmatprep.subr.mxu0 0.0
  %339 = vmatpush2.msra.mxu0 0.0
  %340 = vmatprep.subr.mxu0 0.0
  %341 = vmatpush2.msra.mxu0 0.0
  %342 = vmatprep.subr.mxu0 0.0
  %343 = vmatpush2.msra.mxu0 0.0
  %344 = vmatprep.subr.mxu0 0.0
  %345 = vmatpush2.msra.mxu0 0.0
  %346 = vmatprep.subr.mxu0 0.0
  %347 = vmatpush2.msra.mxu0 0.0
  %348 = vmatprep.subr.mxu0 0.0
  %349 = vmatpush2.msra.mxu0 0.0
  %350 = vmatprep.subr.mxu0 0.0
  %351 = vmatpush2.msra.mxu0 0.0
  %352 = vmatprep.subr.mxu0 0.0
  %353 = vmatpush2.msra.mxu0 0.0
  %354 = vmatprep.subr.mxu0 0.0
  %355 = vmatpush2.msra.mxu0 0.0
  %356 = vmatprep.subr.mxu0 0.0
  %357 = vmatpush2.msra.mxu0 0.0
  %358 = vmatprep.subr.mxu0 0.0
  %359 = vmatpush2.msra.mxu0 0.0
  %360 = vmatprep.subr.mxu0 0.0
  %361 = vmatpush2.msra.mxu0 0.0
  %362 = vmatprep.subr.mxu0 0.0
  %363 = vmatpush2.msra.mxu0 0.0
  %364 = vmatprep.subr.mxu0 0.0
  %365 = vmatpush2.msra.mxu0 0.0
  %366 = vmatprep.subr.mxu0 0.0
  %367 = vmatpush2.msra.mxu0 0.0
  %368 = vmatprep.subr.mxu0 0.0
  %369 = vmatpush2.msra.mxu0 0.0
  %370 = vmatprep.mubr.f32.mxu0 0.0
  %371 = vmatmul.mubr.f32.gmra.mxu0 %v233
  %v372 = vpop.f32.mrf.mxu0
  %v373 = vadd.f32 0.0, %v372
  %v374 = vpop.f32.mrf.mxu0
  %v375 = vadd.f32 0.0, %v374
  %376 = vdwg.mxu0
  %v377 = vmax.f32 %v155, %v302
  %v378 = vmax.f32 %v157, %v304
  %v379 = vmax.f32 %v226, %v373
  %v380 = vmax.f32 %v228, %v375
  %s381 = scalar_lea.vmem %s0, 16
  %v382 = vld [vmem:[%s381] sm:$0x3f]
  %v384 = vsel %vm71, %v382, 0
  %386 = vmatprep.subr.mxu0 0.0
  %387 = vmatpush1.msra.mxu0 0.0
  %388 = vmatprep.subr.mxu0 0.0
  %389 = vmatpush1.msra.mxu0 0.0
  %390 = vmatprep.subr.mxu0 %v80
  %391 = vmatpush1.msra.mxu0 %v77
  %392 = vmatprep.subr.mxu0 %v63
  %393 = vmatpush1.msra.mxu0 %v62
  %394 = vmatprep.subr.mxu0 %v59
  %395 = vmatpush1.msra.mxu0 %v58
  %396 = vmatprep.subr.mxu0 %v55
  %397 = vmatpush1.msra.mxu0 %v54
  %398 = vmatprep.subr.mxu0 %v51
  %399 = vmatpush1.msra.mxu0 %v50
  %400 = vmatprep.subr.mxu0 %v47
  %401 = vmatpush1.msra.mxu0 %v46
  %402 = vmatprep.subr.mxu0 %v43
  %403 = vmatpush1.msra.mxu0 %v42
  %404 = vmatprep.subr.mxu0 %v39
  %405 = vmatpush1.msra.mxu0 %v38
  %406 = vmatprep.subr.mxu0 %v35
  %407 = vmatpush1.msra.mxu0 %v34
  %408 = vmatprep.subr.mxu0 %v31
  %409 = vmatpush1.msra.mxu0 %v30
  %410 = vmatprep.subr.mxu0 %v27
  %411 = vmatpush1.msra.mxu0 %v26
  %412 = vmatprep.subr.mxu0 %v23
  %413 = vmatpush1.msra.mxu0 %v22
  %414 = vmatprep.subr.mxu0 %v19
  %415 = vmatpush1.msra.mxu0 %v18
  %416 = vmatprep.subr.mxu0 %v15
  %417 = vmatpush1.msra.mxu0 %v14
  %418 = vmatprep.subr.mxu0 0.0
  %419 = vmatpush2.msra.mxu0 0.0
  %420 = vmatprep.subr.mxu0 0.0
  %421 = vmatpush2.msra.mxu0 0.0
  %422 = vmatprep.subr.mxu0 0.0
  %423 = vmatpush2.msra.mxu0 0.0
  %424 = vmatprep.subr.mxu0 0.0
  %425 = vmatpush2.msra.mxu0 0.0
  %426 = vmatprep.subr.mxu0 0.0
  %427 = vmatpush2.msra.mxu0 0.0
  %428 = vmatprep.subr.mxu0 0.0
  %429 = vmatpush2.msra.mxu0 0.0
  %430 = vmatprep.subr.mxu0 0.0
  %431 = vmatpush2.msra.mxu0 0.0
  %432 = vmatprep.subr.mxu0 0.0
  %433 = vmatpush2.msra.mxu0 0.0
  %434 = vmatprep.subr.mxu0 0.0
  %435 = vmatpush2.msra.mxu0 0.0
  %436 = vmatprep.subr.mxu0 0.0
  %437 = vmatpush2.msra.mxu0 0.0
  %438 = vmatprep.subr.mxu0 0.0
  %439 = vmatpush2.msra.mxu0 0.0
  %440 = vmatprep.subr.mxu0 0.0
  %441 = vmatpush2.msra.mxu0 0.0
  %442 = vmatprep.subr.mxu0 0.0
  %443 = vmatpush2.msra.mxu0 0.0
  %444 = vmatprep.subr.mxu0 0.0
  %445 = vmatpush2.msra.mxu0 0.0
  %446 = vmatprep.subr.mxu0 0.0
  %447 = vmatpush2.msra.mxu0 0.0
  %448 = vmatprep.subr.mxu0 0.0
  %449 = vmatpush2.msra.mxu0 0.0
  %450 = vmatprep.mubr.f32.mxu0 0.0
  %451 = vmatmul.mubr.f32.gmra.mxu0 %v384
  %v452 = vpop.f32.mrf.mxu0
  %v453 = vadd.f32 0.0, %v452
  %v454 = vpop.f32.mrf.mxu0
  %v455 = vadd.f32 0.0, %v454
  %456 = vdwg.mxu0
  %457 = vmatprep.subr.mxu0 0.0
  %458 = vmatpush1.msra.mxu0 0.0
  %459 = vmatprep.subr.mxu0 0.0
  %460 = vmatpush1.msra.mxu0 0.0
  %461 = vmatprep.subr.mxu0 %v86
  %462 = vmatpush1.msra.mxu0 %v83
  %463 = vmatprep.subr.mxu0 %v65
  %464 = vmatpush1.msra.mxu0 %v64
  %465 = vmatprep.subr.mxu0 %v61
  %466 = vmatpush1.msra.mxu0 %v60
  %467 = vmatprep.subr.mxu0 %v57
  %468 = vmatpush1.msra.mxu0 %v56
  %469 = vmatprep.subr.mxu0 %v53
  %470 = vmatpush1.msra.mxu0 %v52
  %471 = vmatprep.subr.mxu0 %v49
  %472 = vmatpush1.msra.mxu0 %v48
  %473 = vmatprep.subr.mxu0 %v45
  %474 = vmatpush1.msra.mxu0 %v44
  %475 = vmatprep.subr.mxu0 %v41
  %476 = vmatpush1.msra.mxu0 %v40
  %477 = vmatprep.subr.mxu0 %v37
  %478 = vmatpush1.msra.mxu0 %v36
  %479 = vmatprep.subr.mxu0 %v33
  %480 = vmatpush1.msra.mxu0 %v32
  %481 = vmatprep.subr.mxu0 %v29
  %482 = vmatpush1.msra.mxu0 %v28
  %483 = vmatprep.subr.mxu0 %v25
  %484 = vmatpush1.msra.mxu0 %v24
  %485 = vmatprep.subr.mxu0 %v21
  %486 = vmatpush1.msra.mxu0 %v20
  %487 = vmatprep.subr.mxu0 %v17
  %488 = vmatpush1.msra.mxu0 %v16
  %489 = vmatprep.subr.mxu0 0.0
  %490 = vmatpush2.msra.mxu0 0.0
  %491 = vmatprep.subr.mxu0 0.0
  %492 = vmatpush2.msra.mxu0 0.0
  %493 = vmatprep.subr.mxu0 0.0
  %494 = vmatpush2.msra.mxu0 0.0
  %495 = vmatprep.subr.mxu0 0.0
  %496 = vmatpush2.msra.mxu0 0.0
  %497 = vmatprep.subr.mxu0 0.0
  %498 = vmatpush2.msra.mxu0 0.0
  %499 = vmatprep.subr.mxu0 0.0
  %500 = vmatpush2.msra.mxu0 0.0
  %501 = vmatprep.subr.mxu0 0.0
  %502 = vmatpush2.msra.mxu0 0.0
  %503 = vmatprep.subr.mxu0 0.0
  %504 = vmatpush2.msra.mxu0 0.0
  %505 = vmatprep.subr.mxu0 0.0
  %506 = vmatpush2.msra.mxu0 0.0
  %507 = vmatprep.subr.mxu0 0.0
  %508 = vmatpush2.msra.mxu0 0.0
  %509 = vmatprep.subr.mxu0 0.0
  %510 = vmatpush2.msra.mxu0 0.0
  %511 = vmatprep.subr.mxu0 0.0
  %512 = vmatpush2.msra.mxu0 0.0
  %513 = vmatprep.subr.mxu0 0.0
  %514 = vmatpush2.msra.mxu0 0.0
  %515 = vmatprep.subr.mxu0 0.0
  %516 = vmatpush2.msra.mxu0 0.0
  %517 = vmatprep.subr.mxu0 0.0
  %518 = vmatpush2.msra.mxu0 0.0
  %519 = vmatprep.subr.mxu0 0.0
  %520 = vmatpush2.msra.mxu0 0.0
  %521 = vmatprep.mubr.f32.mxu0 0.0
  %522 = vmatmul.mubr.f32.gmra.mxu0 %v384
  %v523 = vpop.f32.mrf.mxu0
  %v524 = vadd.f32 0.0, %v523
  %v525 = vpop.f32.mrf.mxu0
  %v526 = vadd.f32 0.0, %v525
  %527 = vdwg.mxu0
  %v528 = vmax.f32 %v377, %v453
  %v529 = vmax.f32 %v378, %v455
  %v530 = vmax.f32 %v379, %v524
  %v531 = vmax.f32 %v380, %v526
  %s532 = scalar_lea.vmem %s0, 24
  %v533 = vld [vmem:[%s532] sm:$0x3f]
  %v535 = vsel %vm71, %v533, 0
  %537 = vmatprep.subr.mxu0 0.0
  %538 = vmatpush1.msra.mxu0 0.0
  %539 = vmatprep.subr.mxu0 0.0
  %540 = vmatpush1.msra.mxu0 0.0
  %541 = vmatprep.subr.mxu0 %v80
  %542 = vmatpush1.msra.mxu0 %v77
  %543 = vmatprep.subr.mxu0 %v63
  %544 = vmatpush1.msra.mxu0 %v62
  %545 = vmatprep.subr.mxu0 %v59
  %546 = vmatpush1.msra.mxu0 %v58
  %547 = vmatprep.subr.mxu0 %v55
  %548 = vmatpush1.msra.mxu0 %v54
  %549 = vmatprep.subr.mxu0 %v51
  %550 = vmatpush1.msra.mxu0 %v50
  %551 = vmatprep.subr.mxu0 %v47
  %552 = vmatpush1.msra.mxu0 %v46
  %553 = vmatprep.subr.mxu0 %v43
  %554 = vmatpush1.msra.mxu0 %v42
  %555 = vmatprep.subr.mxu0 %v39
  %556 = vmatpush1.msra.mxu0 %v38
  %557 = vmatprep.subr.mxu0 %v35
  %558 = vmatpush1.msra.mxu0 %v34
  %559 = vmatprep.subr.mxu0 %v31
  %560 = vmatpush1.msra.mxu0 %v30
  %561 = vmatprep.subr.mxu0 %v27
  %562 = vmatpush1.msra.mxu0 %v26
  %563 = vmatprep.subr.mxu0 %v23
  %564 = vmatpush1.msra.mxu0 %v22
  %565 = vmatprep.subr.mxu0 %v19
  %566 = vmatpush1.msra.mxu0 %v18
  %567 = vmatprep.subr.mxu0 %v15
  %568 = vmatpush1.msra.mxu0 %v14
  %569 = vmatprep.subr.mxu0 0.0
  %570 = vmatpush2.msra.mxu0 0.0
  %571 = vmatprep.subr.mxu0 0.0
  %572 = vmatpush2.msra.mxu0 0.0
  %573 = vmatprep.subr.mxu0 0.0
  %574 = vmatpush2.msra.mxu0 0.0
  %575 = vmatprep.subr.mxu0 0.0
  %576 = vmatpush2.msra.mxu0 0.0
  %577 = vmatprep.subr.mxu0 0.0
  %578 = vmatpush2.msra.mxu0 0.0
  %579 = vmatprep.subr.mxu0 0.0
  %580 = vmatpush2.msra.mxu0 0.0
  %581 = vmatprep.subr.mxu0 0.0
  %582 = vmatpush2.msra.mxu0 0.0
  %583 = vmatprep.subr.mxu0 0.0
  %584 = vmatpush2.msra.mxu0 0.0
  %585 = vmatprep.subr.mxu0 0.0
  %586 = vmatpush2.msra.mxu0 0.0
  %587 = vmatprep.subr.mxu0 0.0
  %588 = vmatpush2.msra.mxu0 0.0
  %589 = vmatprep.subr.mxu0 0.0
  %590 = vmatpush2.msra.mxu0 0.0
  %591 = vmatprep.subr.mxu0 0.0
  %592 = vmatpush2.msra.mxu0 0.0
  %593 = vmatprep.subr.mxu0 0.0
  %594 = vmatpush2.msra.mxu0 0.0
  %595 = vmatprep.subr.mxu0 0.0
  %596 = vmatpush2.msra.mxu0 0.0
  %597 = vmatprep.subr.mxu0 0.0
  %598 = vmatpush2.msra.mxu0 0.0
  %599 = vmatprep.subr.mxu0 0.0
  %600 = vmatpush2.msra.mxu0 0.0
  %601 = vmatprep.mubr.f32.mxu0 0.0
  %602 = vmatmul.mubr.f32.gmra.mxu0 %v535
  %v603 = vpop.f32.mrf.mxu0
  %v604 = vadd.f32 0.0, %v603
  %v605 = vpop.f32.mrf.mxu0
  %v606 = vadd.f32 0.0, %v605
  %607 = vdwg.mxu0
  %608 = vmatprep.subr.mxu0 0.0
  %609 = vmatpush1.msra.mxu0 0.0
  %610 = vmatprep.subr.mxu0 0.0
  %611 = vmatpush1.msra.mxu0 0.0
  %612 = vmatprep.subr.mxu0 %v86
  %613 = vmatpush1.msra.mxu0 %v83
  %614 = vmatprep.subr.mxu0 %v65
  %615 = vmatpush1.msra.mxu0 %v64
  %616 = vmatprep.subr.mxu0 %v61
  %617 = vmatpush1.msra.mxu0 %v60
  %618 = vmatprep.subr.mxu0 %v57
  %619 = vmatpush1.msra.mxu0 %v56
  %620 = vmatprep.subr.mxu0 %v53
  %621 = vmatpush1.msra.mxu0 %v52
  %622 = vmatprep.subr.mxu0 %v49
  %623 = vmatpush1.msra.mxu0 %v48
  %624 = vmatprep.subr.mxu0 %v45
  %625 = vmatpush1.msra.mxu0 %v44
  %626 = vmatprep.subr.mxu0 %v41
  %627 = vmatpush1.msra.mxu0 %v40
  %628 = vmatprep.subr.mxu0 %v37
  %629 = vmatpush1.msra.mxu0 %v36
  %630 = vmatprep.subr.mxu0 %v33
  %631 = vmatpush1.msra.mxu0 %v32
  %632 = vmatprep.subr.mxu0 %v29
  %633 = vmatpush1.msra.mxu0 %v28
  %634 = vmatprep.subr.mxu0 %v25
  %635 = vmatpush1.msra.mxu0 %v24
  %636 = vmatprep.subr.mxu0 %v21
  %637 = vmatpush1.msra.mxu0 %v20
  %638 = vmatprep.subr.mxu0 %v17
  %639 = vmatpush1.msra.mxu0 %v16
  %640 = vmatprep.subr.mxu0 0.0
  %641 = vmatpush2.msra.mxu0 0.0
  %642 = vmatprep.subr.mxu0 0.0
  %643 = vmatpush2.msra.mxu0 0.0
  %644 = vmatprep.subr.mxu0 0.0
  %645 = vmatpush2.msra.mxu0 0.0
  %646 = vmatprep.subr.mxu0 0.0
  %647 = vmatpush2.msra.mxu0 0.0
  %648 = vmatprep.subr.mxu0 0.0
  %649 = vmatpush2.msra.mxu0 0.0
  %650 = vmatprep.subr.mxu0 0.0
  %651 = vmatpush2.msra.mxu0 0.0
  %652 = vmatprep.subr.mxu0 0.0
  %653 = vmatpush2.msra.mxu0 0.0
  %654 = vmatprep.subr.mxu0 0.0
  %655 = vmatpush2.msra.mxu0 0.0
  %656 = vmatprep.subr.mxu0 0.0
  %657 = vmatpush2.msra.mxu0 0.0
  %658 = vmatprep.subr.mxu0 0.0
  %659 = vmatpush2.msra.mxu0 0.0
  %660 = vmatprep.subr.mxu0 0.0
  %661 = vmatpush2.msra.mxu0 0.0
  %662 = vmatprep.subr.mxu0 0.0
  %663 = vmatpush2.msra.mxu0 0.0
  %664 = vmatprep.subr.mxu0 0.0
  %665 = vmatpush2.msra.mxu0 0.0
  %666 = vmatprep.subr.mxu0 0.0
  %667 = vmatpush2.msra.mxu0 0.0
  %668 = vmatprep.subr.mxu0 0.0
  %669 = vmatpush2.msra.mxu0 0.0
  %670 = vmatprep.subr.mxu0 0.0
  %671 = vmatpush2.msra.mxu0 0.0
  %672 = vmatprep.mubr.f32.mxu0 0.0
  %673 = vmatmul.mubr.f32.gmra.mxu0 %v535
  %v674 = vpop.f32.mrf.mxu0
  %v675 = vadd.f32 0.0, %v674
  %v676 = vpop.f32.mrf.mxu0
  %v677 = vadd.f32 0.0, %v676
  %678 = vdwg.mxu0
  %v679 = vmax.f32 %v528, %v604
  %v680 = vmax.f32 %v529, %v606
  %v681 = vmax.f32 %v530, %v675
  %v682 = vmax.f32 %v531, %v677
  %v683 = vld [vmem:[%s1] sm:$0x3f]
  %685 = vset.pattern.permute.xlu0 0
  %686 = vperm.xlu0 %685, %v683
  %v687 = vpop.permute.xlu0 %686
  %v689 = vadd.f32 %v679, %v687
  %v690 = vadd.f32 %v680, %v687
  %v691 = vadd.f32 %v681, %v687
  %v692 = vadd.f32 %v682, %v687
  %v693 = vmax.f32 %v689, 0.0
  %v694 = vmax.f32 %v690, 0.0
  %v695 = vmax.f32 %v691, 0.0
  %v696 = vmax.f32 %v692, 0.0
  %697 = vst [vmem:[%s3] sm:$0x3f] %v693
  %698 = vst [vmem:[%s3 + $0x8] sm:$0x3f] %v694
  %699 = vst [vmem:[%s3 + $0x10] sm:$0x3f] %v695
  %vm700 = vcmask 62464
  %701 = vst.msk [vmem:[%s3 + $0x18] sm:$0x3f] %vm700, %v696
  // Predicated region
  $region14: #{net_forward.3} parent=0 // pred_check
    _
  $region15: #{net_forward.3} parent=0 // pred_check_branch
    %703 = sbr.rel (0) target = $region17
  $region16: #{net_forward.3} parent=0 // pred_region
    _
  $region17: #{net_forward.3} parent=0 // pred_fallthru
    _
  // Predicated region
  $region18: #{net_forward.3} parent=0 // pred_check
    _
  $region19: #{net_forward.3} parent=0 // pred_check_branch
    %705 = sbr.rel (0) target = $region21
  $region20: #{net_forward.3} parent=0 // pred_region
    _
  $region21: #{net_forward.3} parent=0 // pred_fallthru
    _

// kernel: net_forward.4
$region0: #{net_forward.4}
  #allocation0 [shape = 'u32[]', space=smem, size = 0x4, offset = 0x4, fixed_abs, tag = 'smem constant byte address 0x4 - core index']
  #allocation1 [shape = 'u32[144,128]{1,0:T(1,128)}', space=vmem, size = 0x12000, scoped, tag = 'internal scratch']
  %s0 = inlined_call_operand.vmem [shape: f32[4,16,216], index: 0, kind: input, shape index: {}]
  %s1 = inlined_call_operand.vmem [shape: f32[16,1], index: 1, kind: input, shape index: {}]
  %s2 = inlined_call_operand.vmem [shape: f32[216,50], index: 2, kind: input, shape index: {}]
  %s3 = inlined_call_operand.vmem [shape: f32[16,50], index: 3, kind: output, shape index: {}]
  %s4 = sld [smem:[#allocation0]]
  $region22: #{net_forward.4} parent=0
    _
  %s6 = ssub.s32 1, %s4
  %s7 = scalar_select 0, %s6, %s4
  // Predicated region
  $region2: #{net_forward.4} parent=0 // pred_check
    _
  $region3: #{net_forward.4} parent=0 // pred_check_branch
    %9 = sbr.rel (0) target = $region5
  $region4: #{net_forward.4} parent=0 // pred_region
    _
  $region5: #{net_forward.4} parent=0 // pred_fallthru
    _
  // Predicated region
  $region6: #{net_forward.4} parent=0 // pred_check
    _
  $region7: #{net_forward.4} parent=0 // pred_check_branch
    %11 = sbr.rel (0) target = $region9
  $region8: #{net_forward.4} parent=0 // pred_region
    _
  $region9: #{net_forward.4} parent=0 // pred_fallthru
    _
  // Predicated region
  $region10: #{net_forward.4} parent=0 // pred_check
    _
  $region11: #{net_forward.4} parent=0 // pred_check_branch
    %13 = sbr.rel (0) target = $region13
  $region12: #{net_forward.4} parent=0 // pred_region
    _
  $region13: #{net_forward.4} parent=0 // pred_fallthru
    _
  %v14 = vld [vmem:[%s2] sm:$0xff]
  %v15 = vld [vmem:[%s2 + $0x8] sm:$0xff]
  %v16 = vld [vmem:[%s2 + $0x10] sm:$0xff]
  %v17 = vld [vmem:[%s2 + $0x18] sm:$0xff]
  %v18 = vld [vmem:[%s2 + $0x20] sm:$0xff]
  %v19 = vld [vmem:[%s2 + $0x28] sm:$0xff]
  %v20 = vld [vmem:[%s2 + $0x30] sm:$0xff]
  %v21 = vld [vmem:[%s2 + $0x38] sm:$0xff]
  %v22 = vld [vmem:[%s2 + $0x40] sm:$0xff]
  %v23 = vld [vmem:[%s2 + $0x48] sm:$0xff]
  %v24 = vld [vmem:[%s2 + $0x50] sm:$0xff]
  %v25 = vld [vmem:[%s2 + $0x58] sm:$0xff]
  %v26 = vld [vmem:[%s2 + $0x60] sm:$0xff]
  %v27 = vld [vmem:[%s2 + $0x68] sm:$0xff]
  %v28 = vld [vmem:[%s2 + $0x70] sm:$0xff]
  %v29 = vld [vmem:[%s2 + $0x78] sm:$0xff]
  %v30 = vld [vmem:[%s2 + $0x80] sm:$0xff]
  %v31 = vld [vmem:[%s2 + $0x88] sm:$0xff]
  %v32 = vld [vmem:[%s2 + $0x90] sm:$0xff]
  %v33 = vld [vmem:[%s2 + $0x98] sm:$0xff]
  %v34 = vld [vmem:[%s2 + $0xa0] sm:$0xff]
  %v35 = vld [vmem:[%s2 + $0xa8] sm:$0xff]
  %v36 = vld [vmem:[%s2 + $0xb0] sm:$0xff]
  %v37 = vld [vmem:[%s2 + $0xb8] sm:$0xff]
  %v38 = vld [vmem:[%s2 + $0xc0] sm:$0xff]
  %v39 = vld [vmem:[%s2 + $0xc8] sm:$0xff]
  %v40 = vld [vmem:[%s2 + $0xd0] sm:$0xff]
  %v41 = vld [vmem:[%s0] sm:$0xff]
  %v42 = vld [vmem:[%s0 + $0x8] sm:$0xff]
  %v43 = vld [vmem:[%s0 + $0x10] sm:$0xff]
  %v44 = vld [vmem:[%s0 + $0x18] sm:$0xff]
  %vm45 = vcmask 719872
  %v47 = vsel %vm45, %v42, 0
  %v50 = vsel %vm45, %v44, 0
  %52 = vmatprep.subr.mxu0 0.0
  %53 = vmatpush1.msra.mxu0 %v29
  %54 = vmatprep.subr.mxu0 0.0
  %55 = vmatpush1.msra.mxu0 %v28
  %56 = vmatprep.subr.mxu0 0.0
  %57 = vmatpush1.msra.mxu0 %v27
  %58 = vmatprep.subr.mxu0 0.0
  %59 = vmatpush1.msra.mxu0 %v26
  %60 = vmatprep.subr.mxu0 0.0
  %61 = vmatpush1.msra.mxu0 %v25
  %62 = vmatprep.subr.mxu0 0.0
  %63 = vmatpush1.msra.mxu0 %v24
  %64 = vmatprep.subr.mxu0 0.0
  %65 = vmatpush1.msra.mxu0 %v23
  %66 = vmatprep.subr.mxu0 0.0
  %67 = vmatpush1.msra.mxu0 %v22
  %68 = vmatprep.subr.mxu0 0.0
  %69 = vmatpush1.msra.mxu0 %v21
  %70 = vmatprep.subr.mxu0 0.0
  %71 = vmatpush1.msra.mxu0 %v20
  %72 = vmatprep.subr.mxu0 0.0
  %73 = vmatpush1.msra.mxu0 %v19
  %74 = vmatprep.subr.mxu0 0.0
  %75 = vmatpush1.msra.mxu0 %v18
  %76 = vmatprep.subr.mxu0 0.0
  %77 = vmatpush1.msra.mxu0 %v17
  %78 = vmatprep.subr.mxu0 0.0
  %79 = vmatpush1.msra.mxu0 %v16
  %80 = vmatprep.subr.mxu0 0.0
  %81 = vmatpush1.msra.mxu0 %v15
  %82 = vmatprep.subr.mxu0 0.0
  %83 = vmatpush1.msra.mxu0 %v14
  %84 = vmatprep.subr.mxu0 0.0
  %85 = vmatpush2.msra.mxu0 0.0
  %86 = vmatprep.subr.mxu0 0.0
  %87 = vmatpush2.msra.mxu0 0.0
  %88 = vmatprep.subr.mxu0 0.0
  %89 = vmatpush2.msra.mxu0 0.0
  %90 = vmatprep.subr.mxu0 0.0
  %91 = vmatpush2.msra.mxu0 0.0
  %92 = vmatprep.subr.mxu0 0.0
  %93 = vmatpush2.msra.mxu0 0.0
  %94 = vmatprep.subr.mxu0 0.0
  %95 = vmatpush2.msra.mxu0 %v40
  %96 = vmatprep.subr.mxu0 0.0
  %97 = vmatpush2.msra.mxu0 %v39
  %98 = vmatprep.subr.mxu0 0.0
  %99 = vmatpush2.msra.mxu0 %v38
  %100 = vmatprep.subr.mxu0 0.0
  %101 = vmatpush2.msra.mxu0 %v37
  %102 = vmatprep.subr.mxu0 0.0
  %103 = vmatpush2.msra.mxu0 %v36
  %104 = vmatprep.subr.mxu0 0.0
  %105 = vmatpush2.msra.mxu0 %v35
  %106 = vmatprep.subr.mxu0 0.0
  %107 = vmatpush2.msra.mxu0 %v34
  %108 = vmatprep.subr.mxu0 0.0
  %109 = vmatpush2.msra.mxu0 %v33
  %110 = vmatprep.subr.mxu0 0.0
  %111 = vmatpush2.msra.mxu0 %v32
  %112 = vmatprep.subr.mxu0 0.0
  %113 = vmatpush2.msra.mxu0 %v31
  %114 = vmatprep.subr.mxu0 0.0
  %115 = vmatpush2.msra.mxu0 %v30
  %116 = vmatprep.mubr.f32.mxu0 %v47
  %117 = vmatmul.mubr.f32.gmra.mxu0 %v41
  %v118 = vpop.f32.mrf.mxu0
  %v119 = vadd.f32 0.0, %v118
  %v120 = vpop.f32.mrf.mxu0
  %121 = vmatprep.mubr.f32.mxu0 %v50
  %122 = vmatmul.mubr.f32.gmra.mxu0 %v43
  %v123 = vpop.f32.mrf.mxu0
  %v124 = vadd.f32 0.0, %v123
  %v125 = vpop.f32.mrf.mxu0
  %126 = vdwg.mxu0
  %s127 = scalar_lea.vmem %s0, 32
  %v128 = vld [vmem:[%s127] sm:$0xff]
  %v129 = vld [vmem:[%s127 + $0x8] sm:$0xff]
  %v130 = vld [vmem:[%s127 + $0x10] sm:$0xff]
  %v131 = vld [vmem:[%s127 + $0x18] sm:$0xff]
  %v133 = vsel %vm45, %v129, 0
  %v136 = vsel %vm45, %v131, 0
  %138 = vmatprep.subr.mxu0 0.0
  %139 = vmatpush1.msra.mxu0 %v29
  %140 = vmatprep.subr.mxu0 0.0
  %141 = vmatpush1.msra.mxu0 %v28
  %142 = vmatprep.subr.mxu0 0.0
  %143 = vmatpush1.msra.mxu0 %v27
  %144 = vmatprep.subr.mxu0 0.0
  %145 = vmatpush1.msra.mxu0 %v26
  %146 = vmatprep.subr.mxu0 0.0
  %147 = vmatpush1.msra.mxu0 %v25
  %148 = vmatprep.subr.mxu0 0.0
  %149 = vmatpush1.msra.mxu0 %v24
  %150 = vmatprep.subr.mxu0 0.0
  %151 = vmatpush1.msra.mxu0 %v23
  %152 = vmatprep.subr.mxu0 0.0
  %153 = vmatpush1.msra.mxu0 %v22
  %154 = vmatprep.subr.mxu0 0.0
  %155 = vmatpush1.msra.mxu0 %v21
  %156 = vmatprep.subr.mxu0 0.0
  %157 = vmatpush1.msra.mxu0 %v20
  %158 = vmatprep.subr.mxu0 0.0
  %159 = vmatpush1.msra.mxu0 %v19
  %160 = vmatprep.subr.mxu0 0.0
  %161 = vmatpush1.msra.mxu0 %v18
  %162 = vmatprep.subr.mxu0 0.0
  %163 = vmatpush1.msra.mxu0 %v17
  %164 = vmatprep.subr.mxu0 0.0
  %165 = vmatpush1.msra.mxu0 %v16
  %166 = vmatprep.subr.mxu0 0.0
  %167 = vmatpush1.msra.mxu0 %v15
  %168 = vmatprep.subr.mxu0 0.0
  %169 = vmatpush1.msra.mxu0 %v14
  %170 = vmatprep.subr.mxu0 0.0
  %171 = vmatpush2.msra.mxu0 0.0
  %172 = vmatprep.subr.mxu0 0.0
  %173 = vmatpush2.msra.mxu0 0.0
  %174 = vmatprep.subr.mxu0 0.0
  %175 = vmatpush2.msra.mxu0 0.0
  %176 = vmatprep.subr.mxu0 0.0
  %177 = vmatpush2.msra.mxu0 0.0
  %178 = vmatprep.subr.mxu0 0.0
  %179 = vmatpush2.msra.mxu0 0.0
  %180 = vmatprep.subr.mxu0 0.0
  %181 = vmatpush2.msra.mxu0 %v40
  %182 = vmatprep.subr.mxu0 0.0
  %183 = vmatpush2.msra.mxu0 %v39
  %184 = vmatprep.subr.mxu0 0.0
  %185 = vmatpush2.msra.mxu0 %v38
  %186 = vmatprep.subr.mxu0 0.0
  %187 = vmatpush2.msra.mxu0 %v37
  %188 = vmatprep.subr.mxu0 0.0
  %189 = vmatpush2.msra.mxu0 %v36
  %190 = vmatprep.subr.mxu0 0.0
  %191 = vmatpush2.msra.mxu0 %v35
  %192 = vmatprep.subr.mxu0 0.0
  %193 = vmatpush2.msra.mxu0 %v34
  %194 = vmatprep.subr.mxu0 0.0
  %195 = vmatpush2.msra.mxu0 %v33
  %196 = vmatprep.subr.mxu0 0.0
  %197 = vmatpush2.msra.mxu0 %v32
  %198 = vmatprep.subr.mxu0 0.0
  %199 = vmatpush2.msra.mxu0 %v31
  %200 = vmatprep.subr.mxu0 0.0
  %201 = vmatpush2.msra.mxu0 %v30
  %202 = vmatprep.mubr.f32.mxu0 %v133
  %203 = vmatmul.mubr.f32.gmra.mxu0 %v128
  %v204 = vpop.f32.mrf.mxu0
  %v205 = vadd.f32 0.0, %v204
  %v206 = vpop.f32.mrf.mxu0
  %207 = vmatprep.mubr.f32.mxu0 %v136
  %208 = vmatmul.mubr.f32.gmra.mxu0 %v130
  %v209 = vpop.f32.mrf.mxu0
  %v210 = vadd.f32 0.0, %v209
  %v211 = vpop.f32.mrf.mxu0
  %212 = vdwg.mxu0
  %v213 = vmax.f32 %v119, %v205
  %v214 = vmax.f32 %v124, %v210
  %s215 = scalar_lea.vmem %s0, 64
  %v216 = vld [vmem:[%s215] sm:$0xff]
  %v217 = vld [vmem:[%s215 + $0x8] sm:$0xff]
  %v218 = vld [vmem:[%s215 + $0x10] sm:$0xff]
  %v219 = vld [vmem:[%s215 + $0x18] sm:$0xff]
  %v221 = vsel %vm45, %v217, 0
  %v224 = vsel %vm45, %v219, 0
  %226 = vmatprep.subr.mxu0 0.0
  %227 = vmatpush1.msra.mxu0 %v29
  %228 = vmatprep.subr.mxu0 0.0
  %229 = vmatpush1.msra.mxu0 %v28
  %230 = vmatprep.subr.mxu0 0.0
  %231 = vmatpush1.msra.mxu0 %v27
  %232 = vmatprep.subr.mxu0 0.0
  %233 = vmatpush1.msra.mxu0 %v26
  %234 = vmatprep.subr.mxu0 0.0
  %235 = vmatpush1.msra.mxu0 %v25
  %236 = vmatprep.subr.mxu0 0.0
  %237 = vmatpush1.msra.mxu0 %v24
  %238 = vmatprep.subr.mxu0 0.0
  %239 = vmatpush1.msra.mxu0 %v23
  %240 = vmatprep.subr.mxu0 0.0
  %241 = vmatpush1.msra.mxu0 %v22
  %242 = vmatprep.subr.mxu0 0.0
  %243 = vmatpush1.msra.mxu0 %v21
  %244 = vmatprep.subr.mxu0 0.0
  %245 = vmatpush1.msra.mxu0 %v20
  %246 = vmatprep.subr.mxu0 0.0
  %247 = vmatpush1.msra.mxu0 %v19
  %248 = vmatprep.subr.mxu0 0.0
  %249 = vmatpush1.msra.mxu0 %v18
  %250 = vmatprep.subr.mxu0 0.0
  %251 = vmatpush1.msra.mxu0 %v17
  %252 = vmatprep.subr.mxu0 0.0
  %253 = vmatpush1.msra.mxu0 %v16
  %254 = vmatprep.subr.mxu0 0.0
  %255 = vmatpush1.msra.mxu0 %v15
  %256 = vmatprep.subr.mxu0 0.0
  %257 = vmatpush1.msra.mxu0 %v14
  %258 = vmatprep.subr.mxu0 0.0
  %259 = vmatpush2.msra.mxu0 0.0
  %260 = vmatprep.subr.mxu0 0.0
  %261 = vmatpush2.msra.mxu0 0.0
  %262 = vmatprep.subr.mxu0 0.0
  %263 = vmatpush2.msra.mxu0 0.0
  %264 = vmatprep.subr.mxu0 0.0
  %265 = vmatpush2.msra.mxu0 0.0
  %266 = vmatprep.subr.mxu0 0.0
  %267 = vmatpush2.msra.mxu0 0.0
  %268 = vmatprep.subr.mxu0 0.0
  %269 = vmatpush2.msra.mxu0 %v40
  %270 = vmatprep.subr.mxu0 0.0
  %271 = vmatpush2.msra.mxu0 %v39
  %272 = vmatprep.subr.mxu0 0.0
  %273 = vmatpush2.msra.mxu0 %v38
  %274 = vmatprep.subr.mxu0 0.0
  %275 = vmatpush2.msra.mxu0 %v37
  %276 = vmatprep.subr.mxu0 0.0
  %277 = vmatpush2.msra.mxu0 %v36
  %278 = vmatprep.subr.mxu0 0.0
  %279 = vmatpush2.msra.mxu0 %v35
  %280 = vmatprep.subr.mxu0 0.0
  %281 = vmatpush2.msra.mxu0 %v34
  %282 = vmatprep.subr.mxu0 0.0
  %283 = vmatpush2.msra.mxu0 %v33
  %284 = vmatprep.subr.mxu0 0.0
  %285 = vmatpush2.msra.mxu0 %v32
  %286 = vmatprep.subr.mxu0 0.0
  %287 = vmatpush2.msra.mxu0 %v31
  %288 = vmatprep.subr.mxu0 0.0
  %289 = vmatpush2.msra.mxu0 %v30
  %290 = vmatprep.mubr.f32.mxu0 %v221
  %291 = vmatmul.mubr.f32.gmra.mxu0 %v216
  %v292 = vpop.f32.mrf.mxu0
  %v293 = vadd.f32 0.0, %v292
  %v294 = vpop.f32.mrf.mxu0
  %295 = vmatprep.mubr.f32.mxu0 %v224
  %296 = vmatmul.mubr.f32.gmra.mxu0 %v218
  %v297 = vpop.f32.mrf.mxu0
  %v298 = vadd.f32 0.0, %v297
  %v299 = vpop.f32.mrf.mxu0
  %300 = vdwg.mxu0
  %v301 = vmax.f32 %v213, %v293
  %v302 = vmax.f32 %v214, %v298
  %s303 = scalar_lea.vmem %s0, 96
  %v304 = vld [vmem:[%s303] sm:$0xff]
  %v305 = vld [vmem:[%s303 + $0x8] sm:$0xff]
  %v306 = vld [vmem:[%s303 + $0x10] sm:$0xff]
  %v307 = vld [vmem:[%s303 + $0x18] sm:$0xff]
  %v309 = vsel %vm45, %v305, 0
  %v312 = vsel %vm45, %v307, 0
  %314 = vmatprep.subr.mxu0 0.0
  %315 = vmatpush1.msra.mxu0 %v29
  %316 = vmatprep.subr.mxu0 0.0
  %317 = vmatpush1.msra.mxu0 %v28
  %318 = vmatprep.subr.mxu0 0.0
  %319 = vmatpush1.msra.mxu0 %v27
  %320 = vmatprep.subr.mxu0 0.0
  %321 = vmatpush1.msra.mxu0 %v26
  %322 = vmatprep.subr.mxu0 0.0
  %323 = vmatpush1.msra.mxu0 %v25
  %324 = vmatprep.subr.mxu0 0.0
  %325 = vmatpush1.msra.mxu0 %v24
  %326 = vmatprep.subr.mxu0 0.0
  %327 = vmatpush1.msra.mxu0 %v23
  %328 = vmatprep.subr.mxu0 0.0
  %329 = vmatpush1.msra.mxu0 %v22
  %330 = vmatprep.subr.mxu0 0.0
  %331 = vmatpush1.msra.mxu0 %v21
  %332 = vmatprep.subr.mxu0 0.0
  %333 = vmatpush1.msra.mxu0 %v20
  %334 = vmatprep.subr.mxu0 0.0
  %335 = vmatpush1.msra.mxu0 %v19
  %336 = vmatprep.subr.mxu0 0.0
  %337 = vmatpush1.msra.mxu0 %v18
  %338 = vmatprep.subr.mxu0 0.0
  %339 = vmatpush1.msra.mxu0 %v17
  %340 = vmatprep.subr.mxu0 0.0
  %341 = vmatpush1.msra.mxu0 %v16
  %342 = vmatprep.subr.mxu0 0.0
  %343 = vmatpush1.msra.mxu0 %v15
  %344 = vmatprep.subr.mxu0 0.0
  %345 = vmatpush1.msra.mxu0 %v14
  %346 = vmatprep.subr.mxu0 0.0
  %347 = vmatpush2.msra.mxu0 0.0
  %348 = vmatprep.subr.mxu0 0.0
  %349 = vmatpush2.msra.mxu0 0.0
  %350 = vmatprep.subr.mxu0 0.0
  %351 = vmatpush2.msra.mxu0 0.0
  %352 = vmatprep.subr.mxu0 0.0
  %353 = vmatpush2.msra.mxu0 0.0
  %354 = vmatprep.subr.mxu0 0.0
  %355 = vmatpush2.msra.mxu0 0.0
  %356 = vmatprep.subr.mxu0 0.0
  %357 = vmatpush2.msra.mxu0 %v40
  %358 = vmatprep.subr.mxu0 0.0
  %359 = vmatpush2.msra.mxu0 %v39
  %360 = vmatprep.subr.mxu0 0.0
  %361 = vmatpush2.msra.mxu0 %v38
  %362 = vmatprep.subr.mxu0 0.0
  %363 = vmatpush2.msra.mxu0 %v37
  %364 = vmatprep.subr.mxu0 0.0
  %365 = vmatpush2.msra.mxu0 %v36
  %366 = vmatprep.subr.mxu0 0.0
  %367 = vmatpush2.msra.mxu0 %v35
  %368 = vmatprep.subr.mxu0 0.0
  %369 = vmatpush2.msra.mxu0 %v34
  %370 = vmatprep.subr.mxu0 0.0
  %371 = vmatpush2.msra.mxu0 %v33
  %372 = vmatprep.subr.mxu0 0.0
  %373 = vmatpush2.msra.mxu0 %v32
  %374 = vmatprep.subr.mxu0 0.0
  %375 = vmatpush2.msra.mxu0 %v31
  %376 = vmatprep.subr.mxu0 0.0
  %377 = vmatpush2.msra.mxu0 %v30
  %378 = vmatprep.mubr.f32.mxu0 %v309
  %379 = vmatmul.mubr.f32.gmra.mxu0 %v304
  %v380 = vpop.f32.mrf.mxu0
  %v381 = vadd.f32 0.0, %v380
  %v382 = vpop.f32.mrf.mxu0
  %383 = vmatprep.mubr.f32.mxu0 %v312
  %384 = vmatmul.mubr.f32.gmra.mxu0 %v306
  %v385 = vpop.f32.mrf.mxu0
  %v386 = vadd.f32 0.0, %v385
  %v387 = vpop.f32.mrf.mxu0
  %388 = vdwg.mxu0
  %v389 = vmax.f32 %v301, %v381
  %v390 = vmax.f32 %v302, %v386
  %v391 = vld [vmem:[%s1] sm:$0xff]
  %v392 = vld [vmem:[%s1 + $0x8] sm:$0xff]
  %394 = vset.pattern.permute.xlu0 0
  %395 = vperm.xlu0 %394, %v391
  %v396 = vpop.permute.xlu0 %395
  %399 = vset.pattern.permute.xlu0 0
  %400 = vperm.xlu0 %399, %v392
  %v401 = vpop.permute.xlu0 %400
  %v403 = vadd.f32 %v389, %v396
  %v404 = vadd.f32 %v390, %v401
  %v405 = vmax.f32 %v403, 0.0
  %v406 = vmax.f32 %v404, 0.0
  %vm407 = vcmask 408576
  %408 = vst.msk [vmem:[%s3] sm:$0xff] %vm407, %v405
  %409 = vst.msk [vmem:[%s3 + $0x8] sm:$0xff] %vm407, %v406
  // Predicated region
  $region14: #{net_forward.4} parent=0 // pred_check
    _
  $region15: #{net_forward.4} parent=0 // pred_check_branch
    %411 = sbr.rel (0) target = $region17
  $region16: #{net_forward.4} parent=0 // pred_region
    _
  $region17: #{net_forward.4} parent=0 // pred_fallthru
    _
  // Predicated region
  $region18: #{net_forward.4} parent=0 // pred_check
    _
  $region19: #{net_forward.4} parent=0 // pred_check_branch
    %413 = sbr.rel (0) target = $region21
  $region20: #{net_forward.4} parent=0 // pred_region
    _
  $region21: #{net_forward.4} parent=0 // pred_fallthru
    _

// kernel: net_forward.5
$region0: #{net_forward.5}
  #allocation0 [shape = 'u32[]', space=smem, size = 0x4, offset = 0x4, fixed_abs, tag = 'smem constant byte address 0x4 - core index']
  #allocation1 [shape = 'u32[144,128]{1,0:T(1,128)}', space=vmem, size = 0x12000, scoped, tag = 'internal scratch']
  %s0 = inlined_call_operand.vmem [shape: f32[2,400], index: 0, kind: input, shape index: {}]
  %s1 = inlined_call_operand.vmem [shape: f32[400,120], index: 1, kind: input, shape index: {}]
  %s2 = inlined_call_operand.vmem [shape: f32[1,120], index: 2, kind: input, shape index: {}]
  %s3 = inlined_call_operand.vmem [shape: f32[120,84], index: 3, kind: input, shape index: {}]
  %s4 = inlined_call_operand.vmem [shape: f32[1,84], index: 4, kind: input, shape index: {}]
  %s5 = inlined_call_operand.vmem [shape: f32[84,10], index: 5, kind: input, shape index: {}]
  %s6 = inlined_call_operand.vmem [shape: f32[1,10], index: 6, kind: input, shape index: {}]
  %s7 = inlined_call_operand.hbm [shape: f32[2,10], index: 7, kind: output, shape index: {}]
  %s8 = sld [smem:[#allocation0]]
  $region38: #{net_forward.5} parent=0
    _
  %s10 = ssub.s32 1, %s8
  %s11 = scalar_select 0, %s10, %s8
  $region1: #{net_forward.5} parent=0
    #allocation2 [shape = 'u8[1024]{0}', space=vmem, size = 0x400, scoped, tag = 'output window, operand 0, single buffered']
    #allocation3 [shape = 's32[1]{0}', space=sflag, size = 0x4, scoped, tag = 'scoped memory for net_forward.5']
    %12 = vsyncpa [#allocation3], 0
    // Predicated region
    $region2: #{net_forward.5} parent=1 // pred_check
      _
    $region3: #{net_forward.5} parent=1 // pred_check_branch
      %14 = sbr.rel (0) target = $region5
    $region4: #{net_forward.5} parent=1 // pred_region
      _
    $region5: #{net_forward.5} parent=1 // pred_fallthru
      _
    // Predicated region
    $region6: #{net_forward.5} parent=1 // pred_check
      _
    $region7: #{net_forward.5} parent=1 // pred_check_branch
      %16 = sbr.rel (0) target = $region9
    $region8: #{net_forward.5} parent=1 // pred_region
      _
    $region9: #{net_forward.5} parent=1 // pred_fallthru
      _
    // Predicated region
    $region10: #{net_forward.5} parent=1 // pred_check
      _
    $region11: #{net_forward.5} parent=1 // pred_check_branch
      %18 = sbr.rel (0) target = $region13
    $region12: #{net_forward.5} parent=1 // pred_region
      _
    $region13: #{net_forward.5} parent=1 // pred_fallthru
      _
    // Predicated region
    $region14: #{net_forward.5} parent=1 // pred_check
      _
    $region15: #{net_forward.5} parent=1 // pred_check_branch
      %20 = sbr.rel (0) target = $region17
    $region16: #{net_forward.5} parent=1 // pred_region
      _
    $region17: #{net_forward.5} parent=1 // pred_fallthru
      _
    // Predicated region
    $region18: #{net_forward.5} parent=1 // pred_check
      _
    $region19: #{net_forward.5} parent=1 // pred_check_branch
      %22 = sbr.rel (0) target = $region21
    $region20: #{net_forward.5} parent=1 // pred_region
      _
    $region21: #{net_forward.5} parent=1 // pred_fallthru
      _
    // Predicated region
    $region22: #{net_forward.5} parent=1 // pred_check
      _
    $region23: #{net_forward.5} parent=1 // pred_check_branch
      %24 = sbr.rel (0) target = $region25
    $region24: #{net_forward.5} parent=1 // pred_region
      _
    $region25: #{net_forward.5} parent=1 // pred_fallthru
      _
    // Predicated region
    $region26: #{net_forward.5} parent=1 // pred_check
      _
    $region27: #{net_forward.5} parent=1 // pred_check_branch
      %26 = sbr.rel (0) target = $region29
    $region28: #{net_forward.5} parent=1 // pred_region
      _
    $region29: #{net_forward.5} parent=1 // pred_fallthru
      _
    %v27 = vld [vmem:[%s0] sm:$0xff]
    %v28 = vld [vmem:[%s1] sm:$0xff]
    %v29 = vld [vmem:[%s1 + $0x8] sm:$0xff]
    %v30 = vld [vmem:[%s1 + $0x10] sm:$0xff]
    %v31 = vld [vmem:[%s1 + $0x18] sm:$0xff]
    %v32 = vld [vmem:[%s1 + $0x20] sm:$0xff]
    %v33 = vld [vmem:[%s1 + $0x28] sm:$0xff]
    %v34 = vld [vmem:[%s1 + $0x30] sm:$0xff]
    %v35 = vld [vmem:[%s1 + $0x38] sm:$0xff]
    %v36 = vld [vmem:[%s1 + $0x40] sm:$0xff]
    %v37 = vld [vmem:[%s1 + $0x48] sm:$0xff]
    %v38 = vld [vmem:[%s1 + $0x50] sm:$0xff]
    %v39 = vld [vmem:[%s1 + $0x58] sm:$0xff]
    %v40 = vld [vmem:[%s1 + $0x60] sm:$0xff]
    %v41 = vld [vmem:[%s1 + $0x68] sm:$0xff]
    %v42 = vld [vmem:[%s1 + $0x70] sm:$0xff]
    %v43 = vld [vmem:[%s1 + $0x78] sm:$0xff]
    %v44 = vld [vmem:[%s1 + $0x80] sm:$0xff]
    %v45 = vld [vmem:[%s1 + $0x88] sm:$0xff]
    %v46 = vld [vmem:[%s1 + $0x90] sm:$0xff]
    %v47 = vld [vmem:[%s1 + $0x98] sm:$0xff]
    %v48 = vld [vmem:[%s1 + $0xa0] sm:$0xff]
    %v49 = vld [vmem:[%s1 + $0xa8] sm:$0xff]
    %v50 = vld [vmem:[%s1 + $0xb0] sm:$0xff]
    %v51 = vld [vmem:[%s1 + $0xb8] sm:$0xff]
    %v52 = vld [vmem:[%s1 + $0xc0] sm:$0xff]
    %v53 = vld [vmem:[%s1 + $0xc8] sm:$0xff]
    %v54 = vld [vmem:[%s1 + $0xd0] sm:$0xff]
    %v55 = vld [vmem:[%s1 + $0xd8] sm:$0xff]
    %v56 = vld [vmem:[%s1 + $0xe0] sm:$0xff]
    %v57 = vld [vmem:[%s1 + $0xe8] sm:$0xff]
    %v58 = vld [vmem:[%s1 + $0xf0] sm:$0xff]
    %v59 = vld [vmem:[%s1 + $0xf8] sm:$0xff]
    %v60 = vld [vmem:[%s1 + $0x100] sm:$0xff]
    %v61 = vld [vmem:[%s1 + $0x108] sm:$0xff]
    %v62 = vld [vmem:[%s1 + $0x110] sm:$0xff]
    %v63 = vld [vmem:[%s1 + $0x118] sm:$0xff]
    %v64 = vld [vmem:[%s1 + $0x120] sm:$0xff]
    %v65 = vld [vmem:[%s1 + $0x128] sm:$0xff]
    %v66 = vld [vmem:[%s1 + $0x130] sm:$0xff]
    %v67 = vld [vmem:[%s1 + $0x138] sm:$0xff]
    %v68 = vld [vmem:[%s1 + $0x140] sm:$0xff]
    %v69 = vld [vmem:[%s1 + $0x148] sm:$0xff]
    %v70 = vld [vmem:[%s1 + $0x150] sm:$0xff]
    %v71 = vld [vmem:[%s1 + $0x158] sm:$0xff]
    %v72 = vld [vmem:[%s1 + $0x160] sm:$0xff]
    %v73 = vld [vmem:[%s1 + $0x168] sm:$0xff]
    %v74 = vld [vmem:[%s1 + $0x170] sm:$0xff]
    %v75 = vld [vmem:[%s1 + $0x178] sm:$0xff]
    %v76 = vld [vmem:[%s1 + $0x180] sm:$0xff]
    %v77 = vld [vmem:[%s1 + $0x188] sm:$0xff]
    %v78 = vld [vmem:[%s2] sm:$0x1]
    %v80 = vlaneseq
    %v81 = vshrl.u32 %v80, 7
    %v82 = vsub.s32 0, %v81
    %v83 = vrot.slane %v78, %v82
    %v86 = vcombine.high %v27, %v27
    %v88 = vunpack.c.l.s4 1983009808
    %v89 = vunpack.c.0.s8 %v88
    %v90 = vlaneseq
    %v91 = vshrl.u32 %v90, 7
    %v92 = vsub.s32 %v89, %v91
    %v93 = vrot.slane %v27, %v92
    %v95 = vunpack.c.l.s4 1983009808
    %v96 = vunpack.c.0.s8 %v95
    %v97 = vlaneseq
    %v98 = vshrl.u32 %v97, 7
    %v99 = vsub.s32 %v96, %v98
    %v100 = vrot.slane %v86, %v99
    %v101 = vcombine.high %v93, %v93
    %v102 = vcombine.high %v100, %v100
    %vm106 = vcmask 130048
    %v107 = vsel %vm106, %v102, 0
    %109 = vmatprep.subr.mxu0 0.0
    %110 = vmatpush1.msra.mxu0 %v43
    %111 = vmatprep.subr.mxu0 0.0
    %112 = vmatpush1.msra.mxu0 %v42
    %113 = vmatprep.subr.mxu0 0.0
    %114 = vmatpush1.msra.mxu0 %v41
    %115 = vmatprep.subr.mxu0 0.0
    %116 = vmatpush1.msra.mxu0 %v40
    %117 = vmatprep.subr.mxu0 0.0
    %118 = vmatpush1.msra.mxu0 %v39
    %119 = vmatprep.subr.mxu0 0.0
    %120 = vmatpush1.msra.mxu0 %v38
    %121 = vmatprep.subr.mxu0 0.0
    %122 = vmatpush1.msra.mxu0 %v37
    %123 = vmatprep.subr.mxu0 0.0
    %124 = vmatpush1.msra.mxu0 %v36
    %125 = vmatprep.subr.mxu0 0.0
    %126 = vmatpush1.msra.mxu0 %v35
    %127 = vmatprep.subr.mxu0 0.0
    %128 = vmatpush1.msra.mxu0 %v34
    %129 = vmatprep.subr.mxu0 0.0
    %130 = vmatpush1.msra.mxu0 %v33
    %131 = vmatprep.subr.mxu0 0.0
    %132 = vmatpush1.msra.mxu0 %v32
    %133 = vmatprep.subr.mxu0 0.0
    %134 = vmatpush1.msra.mxu0 %v31
    %135 = vmatprep.subr.mxu0 0.0
    %136 = vmatpush1.msra.mxu0 %v30
    %137 = vmatprep.subr.mxu0 0.0
    %138 = vmatpush1.msra.mxu0 %v29
    %139 = vmatprep.subr.mxu0 0.0
    %140 = vmatpush1.msra.mxu0 %v28
    %141 = vmatprep.subr.mxu0 0.0
    %142 = vmatpush2.msra.mxu0 %v59
    %143 = vmatprep.subr.mxu0 0.0
    %144 = vmatpush2.msra.mxu0 %v58
    %145 = vmatprep.subr.mxu0 0.0
    %146 = vmatpush2.msra.mxu0 %v57
    %147 = vmatprep.subr.mxu0 0.0
    %148 = vmatpush2.msra.mxu0 %v56
    %149 = vmatprep.subr.mxu0 0.0
    %150 = vmatpush2.msra.mxu0 %v55
    %151 = vmatprep.subr.mxu0 0.0
    %152 = vmatpush2.msra.mxu0 %v54
    %153 = vmatprep.subr.mxu0 0.0
    %154 = vmatpush2.msra.mxu0 %v53
    %155 = vmatprep.subr.mxu0 0.0
    %156 = vmatpush2.msra.mxu0 %v52
    %157 = vmatprep.subr.mxu0 0.0
    %158 = vmatpush2.msra.mxu0 %v51
    %159 = vmatprep.subr.mxu0 0.0
    %160 = vmatpush2.msra.mxu0 %v50
    %161 = vmatprep.subr.mxu0 0.0
    %162 = vmatpush2.msra.mxu0 %v49
    %163 = vmatprep.subr.mxu0 0.0
    %164 = vmatpush2.msra.mxu0 %v48
    %165 = vmatprep.subr.mxu0 0.0
    %166 = vmatpush2.msra.mxu0 %v47
    %167 = vmatprep.subr.mxu0 0.0
    %168 = vmatpush2.msra.mxu0 %v46
    %169 = vmatprep.subr.mxu0 0.0
    %170 = vmatpush2.msra.mxu0 %v45
    %171 = vmatprep.subr.mxu0 0.0
    %172 = vmatpush2.msra.mxu0 %v44
    %173 = vmatprep.mubr.f32.mxu0 %v101
    %174 = vmatmul.mubr.f32.gmra.mxu0 %v93
    %v175 = vpop.f32.mrf.mxu0
    %v176 = vadd.f32 %v83, %v175
    %v177 = vpop.f32.mrf.mxu0
    %178 = vdwg.mxu0
    %179 = vmatprep.subr.mxu0 0.0
    %180 = vmatpush1.msra.mxu0 %v75
    %181 = vmatprep.subr.mxu0 0.0
    %182 = vmatpush1.msra.mxu0 %v74
    %183 = vmatprep.subr.mxu0 0.0
    %184 = vmatpush1.msra.mxu0 %v73
    %185 = vmatprep.subr.mxu0 0.0
    %186 = vmatpush1.msra.mxu0 %v72
    %187 = vmatprep.subr.mxu0 0.0
    %188 = vmatpush1.msra.mxu0 %v71
    %189 = vmatprep.subr.mxu0 0.0
    %190 = vmatpush1.msra.mxu0 %v70
    %191 = vmatprep.subr.mxu0 0.0
    %192 = vmatpush1.msra.mxu0 %v69
    %193 = vmatprep.subr.mxu0 0.0
    %194 = vmatpush1.msra.mxu0 %v68
    %195 = vmatprep.subr.mxu0 0.0
    %196 = vmatpush1.msra.mxu0 %v67
    %197 = vmatprep.subr.mxu0 0.0
    %198 = vmatpush1.msra.mxu0 %v66
    %199 = vmatprep.subr.mxu0 0.0
    %200 = vmatpush1.msra.mxu0 %v65
    %201 = vmatprep.subr.mxu0 0.0
    %202 = vmatpush1.msra.mxu0 %v64
    %203 = vmatprep.subr.mxu0 0.0
    %204 = vmatpush1.msra.mxu0 %v63
    %205 = vmatprep.subr.mxu0 0.0
    %206 = vmatpush1.msra.mxu0 %v62
    %207 = vmatprep.subr.mxu0 0.0
    %208 = vmatpush1.msra.mxu0 %v61
    %209 = vmatprep.subr.mxu0 0.0
    %210 = vmatpush1.msra.mxu0 %v60
    %211 = vmatprep.subr.mxu0 0.0
    %212 = vmatpush2.msra.mxu0 0.0
    %213 = vmatprep.subr.mxu0 0.0
    %214 = vmatpush2.msra.mxu0 0.0
    %215 = vmatprep.subr.mxu0 0.0
    %216 = vmatpush2.msra.mxu0 0.0
    %217 = vmatprep.subr.mxu0 0.0
    %218 = vmatpush2.msra.mxu0 0.0
    %219 = vmatprep.subr.mxu0 0.0
    %220 = vmatpush2.msra.mxu0 0.0
    %221 = vmatprep.subr.mxu0 0.0
    %222 = vmatpush2.msra.mxu0 0.0
    %223 = vmatprep.subr.mxu0 0.0
    %224 = vmatpush2.msra.mxu0 0.0
    %225 = vmatprep.subr.mxu0 0.0
    %226 = vmatpush2.msra.mxu0 0.0
    %227 = vmatprep.subr.mxu0 0.0
    %228 = vmatpush2.msra.mxu0 0.0
    %229 = vmatprep.subr.mxu0 0.0
    %230 = vmatpush2.msra.mxu0 0.0
    %231 = vmatprep.subr.mxu0 0.0
    %232 = vmatpush2.msra.mxu0 0.0
    %233 = vmatprep.subr.mxu0 0.0
    %234 = vmatpush2.msra.mxu0 0.0
    %235 = vmatprep.subr.mxu0 0.0
    %236 = vmatpush2.msra.mxu0 0.0
    %237 = vmatprep.subr.mxu0 0.0
    %238 = vmatpush2.msra.mxu0 0.0
    %239 = vmatprep.subr.mxu0 0.0
    %240 = vmatpush2.msra.mxu0 %v77
    %241 = vmatprep.subr.mxu0 0.0
    %242 = vmatpush2.msra.mxu0 %v76
    %243 = vmatprep.mubr.f32.mxu0 %v107
    %244 = vmatmul.mubr.f32.gmra.mxu0 %v100
    %v245 = vpop.f32.mrf.mxu0
    %v246 = vadd.f32 %v176, %v245
    %v247 = vpop.f32.mrf.mxu0
    %248 = vdwg.mxu0
    %v249 = vmax.f32 %v246, 0.0
    %v250 = vld [vmem:[%s3] sm:$0xff]
    %v251 = vld [vmem:[%s3 + $0x8] sm:$0xff]
    %v252 = vld [vmem:[%s3 + $0x10] sm:$0xff]
    %v253 = vld [vmem:[%s3 + $0x18] sm:$0xff]
    %v254 = vld [vmem:[%s3 + $0x20] sm:$0xff]
    %v255 = vld [vmem:[%s3 + $0x28] sm:$0xff]
    %v256 = vld [vmem:[%s3 + $0x30] sm:$0xff]
    %v257 = vld [vmem:[%s3 + $0x38] sm:$0xff]
    %v258 = vld [vmem:[%s3 + $0x40] sm:$0xff]
    %v259 = vld [vmem:[%s3 + $0x48] sm:$0xff]
    %v260 = vld [vmem:[%s3 + $0x50] sm:$0xff]
    %v261 = vld [vmem:[%s3 + $0x58] sm:$0xff]
    %v262 = vld [vmem:[%s3 + $0x60] sm:$0xff]
    %v263 = vld [vmem:[%s3 + $0x68] sm:$0xff]
    %v264 = vld [vmem:[%s3 + $0x70] sm:$0xff]
    %v265 = vld [vmem:[%s4] sm:$0x1]
    %v267 = vlaneseq
    %v268 = vshrl.u32 %v267, 7
    %v269 = vsub.s32 0, %v268
    %v270 = vrot.slane %v265, %v269
    %vm272 = vcmask 982016
    %v274 = vsel %vm272, %v249, 0
    %276 = vmatprep.subr.mxu0 0.0
    %277 = vmatpush1.msra.mxu0 0.0
    %278 = vmatprep.subr.mxu0 0.0
    %279 = vmatpush1.msra.mxu0 %v264
    %280 = vmatprep.subr.mxu0 0.0
    %281 = vmatpush1.msra.mxu0 %v263
    %282 = vmatprep.subr.mxu0 0.0
    %283 = vmatpush1.msra.mxu0 %v262
    %284 = vmatprep.subr.mxu0 0.0
    %285 = vmatpush1.msra.mxu0 %v261
    %286 = vmatprep.subr.mxu0 0.0
    %287 = vmatpush1.msra.mxu0 %v260
    %288 = vmatprep.subr.mxu0 0.0
    %289 = vmatpush1.msra.mxu0 %v259
    %290 = vmatprep.subr.mxu0 0.0
    %291 = vmatpush1.msra.mxu0 %v258
    %292 = vmatprep.subr.mxu0 0.0
    %293 = vmatpush1.msra.mxu0 %v257
    %294 = vmatprep.subr.mxu0 0.0
    %295 = vmatpush1.msra.mxu0 %v256
    %296 = vmatprep.subr.mxu0 0.0
    %297 = vmatpush1.msra.mxu0 %v255
    %298 = vmatprep.subr.mxu0 0.0
    %299 = vmatpush1.msra.mxu0 %v254
    %300 = vmatprep.subr.mxu0 0.0
    %301 = vmatpush1.msra.mxu0 %v253
    %302 = vmatprep.subr.mxu0 0.0
    %303 = vmatpush1.msra.mxu0 %v252
    %304 = vmatprep.subr.mxu0 0.0
    %305 = vmatpush1.msra.mxu0 %v251
    %306 = vmatprep.subr.mxu0 0.0
    %307 = vmatpush1.msra.mxu0 %v250
    %308 = vmatprep.subr.mxu0 0.0
    %309 = vmatpush2.msra.mxu0 0.0
    %310 = vmatprep.subr.mxu0 0.0
    %311 = vmatpush2.msra.mxu0 0.0
    %312 = vmatprep.subr.mxu0 0.0
    %313 = vmatpush2.msra.mxu0 0.0
    %314 = vmatprep.subr.mxu0 0.0
    %315 = vmatpush2.msra.mxu0 0.0
    %316 = vmatprep.subr.mxu0 0.0
    %317 = vmatpush2.msra.mxu0 0.0
    %318 = vmatprep.subr.mxu0 0.0
    %319 = vmatpush2.msra.mxu0 0.0
    %320 = vmatprep.subr.mxu0 0.0
    %321 = vmatpush2.msra.mxu0 0.0
    %322 = vmatprep.subr.mxu0 0.0
    %323 = vmatpush2.msra.mxu0 0.0
    %324 = vmatprep.subr.mxu0 0.0
    %325 = vmatpush2.msra.mxu0 0.0
    %326 = vmatprep.subr.mxu0 0.0
    %327 = vmatpush2.msra.mxu0 0.0
    %328 = vmatprep.subr.mxu0 0.0
    %329 = vmatpush2.msra.mxu0 0.0
    %330 = vmatprep.subr.mxu0 0.0
    %331 = vmatpush2.msra.mxu0 0.0
    %332 = vmatprep.subr.mxu0 0.0
    %333 = vmatpush2.msra.mxu0 0.0
    %334 = vmatprep.subr.mxu0 0.0
    %335 = vmatpush2.msra.mxu0 0.0
    %336 = vmatprep.subr.mxu0 0.0
    %337 = vmatpush2.msra.mxu0 0.0
    %338 = vmatprep.subr.mxu0 0.0
    %339 = vmatpush2.msra.mxu0 0.0
    %340 = vmatprep.mubr.f32.mxu0 0.0
    %341 = vmatmul.mubr.f32.gmra.mxu0 %v274
    %v342 = vpop.f32.mrf.mxu0
    %v343 = vadd.f32 %v270, %v342
    %v344 = vpop.f32.mrf.mxu0
    %345 = vdwg.mxu0
    %v346 = vmax.f32 %v343, 0.0
    %v347 = vld [vmem:[%s5] sm:$0xff]
    %v348 = vld [vmem:[%s5 + $0x8] sm:$0xff]
    %v349 = vld [vmem:[%s5 + $0x10] sm:$0xff]
    %v350 = vld [vmem:[%s5 + $0x18] sm:$0xff]
    %v351 = vld [vmem:[%s5 + $0x20] sm:$0xff]
    %v352 = vld [vmem:[%s5 + $0x28] sm:$0xff]
    %v353 = vld [vmem:[%s5 + $0x30] sm:$0xff]
    %v354 = vld [vmem:[%s5 + $0x38] sm:$0xff]
    %v355 = vld [vmem:[%s5 + $0x40] sm:$0xff]
    %v356 = vld [vmem:[%s5 + $0x48] sm:$0xff]
    %v357 = vld [vmem:[%s5 + $0x50] sm:$0xf]
    %v358 = vld [vmem:[%s6] sm:$0x1]
    %v360 = vlaneseq
    %v361 = vshrl.u32 %v360, 7
    %v362 = vsub.s32 0, %v361
    %v363 = vrot.slane %v358, %v362
    %vm365 = vcmask 687104
    %v367 = vsel %vm365, %v346, 0
    %vm369 = vcmask 1043456
    %v371 = vsel %vm369, %v357, 0
    %373 = vmatprep.subr.mxu0 0.0
    %374 = vmatpush1.msra.mxu0 0.0
    %375 = vmatprep.subr.mxu0 0.0
    %376 = vmatpush1.msra.mxu0 0.0
    %377 = vmatprep.subr.mxu0 0.0
    %378 = vmatpush1.msra.mxu0 0.0
    %379 = vmatprep.subr.mxu0 0.0
    %380 = vmatpush1.msra.mxu0 0.0
    %381 = vmatprep.subr.mxu0 0.0
    %382 = vmatpush1.msra.mxu0 0.0
    %383 = vmatprep.subr.mxu0 0.0
    %384 = vmatpush1.msra.mxu0 %v371
    %385 = vmatprep.subr.mxu0 0.0
    %386 = vmatpush1.msra.mxu0 %v356
    %387 = vmatprep.subr.mxu0 0.0
    %388 = vmatpush1.msra.mxu0 %v355
    %389 = vmatprep.subr.mxu0 0.0
    %390 = vmatpush1.msra.mxu0 %v354
    %391 = vmatprep.subr.mxu0 0.0
    %392 = vmatpush1.msra.mxu0 %v353
    %393 = vmatprep.subr.mxu0 0.0
    %394 = vmatpush1.msra.mxu0 %v352
    %395 = vmatprep.subr.mxu0 0.0
    %396 = vmatpush1.msra.mxu0 %v351
    %397 = vmatprep.subr.mxu0 0.0
    %398 = vmatpush1.msra.mxu0 %v350
    %399 = vmatprep.subr.mxu0 0.0
    %400 = vmatpush1.msra.mxu0 %v349
    %401 = vmatprep.subr.mxu0 0.0
    %402 = vmatpush1.msra.mxu0 %v348
    %403 = vmatprep.subr.mxu0 0.0
    %404 = vmatpush1.msra.mxu0 %v347
    %405 = vmatprep.subr.mxu0 0.0
    %406 = vmatpush2.msra.mxu0 0.0
    %407 = vmatprep.subr.mxu0 0.0
    %408 = vmatpush2.msra.mxu0 0.0
    %409 = vmatprep.subr.mxu0 0.0
    %410 = vmatpush2.msra.mxu0 0.0
    %411 = vmatprep.subr.mxu0 0.0
    %412 = vmatpush2.msra.mxu0 0.0
    %413 = vmatprep.subr.mxu0 0.0
    %414 = vmatpush2.msra.mxu0 0.0
    %415 = vmatprep.subr.mxu0 0.0
    %416 = vmatpush2.msra.mxu0 0.0
    %417 = vmatprep.subr.mxu0 0.0
    %418 = vmatpush2.msra.mxu0 0.0
    %419 = vmatprep.subr.mxu0 0.0
    %420 = vmatpush2.msra.mxu0 0.0
    %421 = vmatprep.subr.mxu0 0.0
    %422 = vmatpush2.msra.mxu0 0.0
    %423 = vmatprep.subr.mxu0 0.0
    %424 = vmatpush2.msra.mxu0 0.0
    %425 = vmatprep.subr.mxu0 0.0
    %426 = vmatpush2.msra.mxu0 0.0
    %427 = vmatprep.subr.mxu0 0.0
    %428 = vmatpush2.msra.mxu0 0.0
    %429 = vmatprep.subr.mxu0 0.0
    %430 = vmatpush2.msra.mxu0 0.0
    %431 = vmatprep.subr.mxu0 0.0
    %432 = vmatpush2.msra.mxu0 0.0
    %433 = vmatprep.subr.mxu0 0.0
    %434 = vmatpush2.msra.mxu0 0.0
    %435 = vmatprep.subr.mxu0 0.0
    %436 = vmatpush2.msra.mxu0 0.0
    %437 = vmatprep.mubr.f32.mxu0 0.0
    %438 = vmatmul.mubr.f32.gmra.mxu0 %v367
    %v439 = vpop.f32.mrf.mxu0
    %v440 = vadd.f32 %v363, %v439
    %v441 = vpop.f32.mrf.mxu0
    %442 = vdwg.mxu0
    %vm443 = vcmask 74752
    %444 = vst.msk [vmem:[#allocation2] sm:$0x3] %vm443, %v440
    // Predicated region
    $region30: #{net_forward.5} parent=1 // pred_check
      _
    $region31: #{net_forward.5} parent=1 // pred_check_branch
      %446 = sbr.rel (0) target = $region33
    $region32: #{net_forward.5} parent=1 // pred_region
      %s448 = ssub.s32 32, 32
      %449 = vsyncadd [#allocation3], %s448
      %s451 = sshll.u32 [#allocation2], 4
      %s452 = int_to_ptr.vmem [resolvable:$true] %s451
      %454 = dma.vmem_to_hbm [thread:$0]  %s452, 32, %s7, [#allocation3]
    $region33: #{net_forward.5} parent=1 // pred_fallthru
      _
    // Predicated region
    $region34: #{net_forward.5} parent=1 // pred_check
      _
    $region35: #{net_forward.5} parent=1 // pred_check_branch
      %456 = sbr.rel (0) target = $region37
    $region36: #{net_forward.5} parent=1 // pred_region
      %457 = dma.done [#allocation3], 32
    $region37: #{net_forward.5} parent=1 // pred_fallthru
      _
    %458 = vsyncpa [#allocation3], 1

</llo_original>
